<compile_context>
chip_gen: v6e
topology: v6e:2x2x1
jax: 0.10.0
libtpu: 0.0.40
codegen_flags: <defaults>
</compile_context>

<pallas_src>
import functools

import jax
import jax.numpy as jnp
from jax.experimental import pallas as pl
from jax.experimental.pallas import tpu as pltpu

EPS = 1e-5


def _round_up(x, m):
    return (x + m - 1) // m * m


def _pick_tile_h(N, H, W):
    """Row-block height: divides H, keeps tile rows (th*W) a multiple of 8,
    targets <=2048-row MXU tiles and >=2 total grid steps (v7x dual-TC)."""
    divs = [d for d in range(1, H + 1) if H % d == 0 and (d * W) % 8 == 0]
    if not divs:
        return H
    good = [d for d in divs if d * W <= 2048] or [divs[0]]
    th = max(good)
    if N * (H // th) < 2:
        smaller = [d for d in good if N * (H // d) >= 2]
        if smaller:
            th = max(smaller)
    return th


def _conv_tile(x_ref, w_ref, *, th, W, Cin, Cout):
    """3x3/pad=1 conv for one tile of `th` output rows.

    x_ref: (1, H+2, W+2, Cin) bf16 -- whole padded image, resident in VMEM.
    w_ref: (9, Cin, Cout)     bf16 -- weights, kh*3+kw major.
    Returns [th*W, Cout] f32 (MXU accumulation in f32).
    """
    row0 = pl.program_id(1) * th
    win = x_ref[0, pl.ds(row0, th + 2), :, :]              # [th+2, W+2, Cin]
    acc = jnp.zeros((th * W, Cout), jnp.float32)
    for kh in range(3):
        for kw in range(3):
            xs = win[kh:kh + th, kw:kw + W, :].reshape(th * W, Cin)
            acc = acc + jnp.dot(xs, w_ref[kh * 3 + kw],
                                preferred_element_type=jnp.float32)
    return acc


# ---------------- pass 1: streaming BN statistics (no y written) -------------
def conv_stats_kernel(x_ref, w_ref, sum_ref, m2_ref, *, th, W, Cin, Cout):
    y = _conv_tile(x_ref, w_ref, th=th, W=W, Cin=Cin, Cout=Cout)
    s = jnp.sum(y, axis=0, keepdims=True)                  # [1, Cout]
    mu = s * (1.0 / y.shape[0])
    d = y - mu
    m2 = jnp.sum(d * d, axis=0, keepdims=True)             # [1, Cout]
    sum_ref[...] = jnp.broadcast_to(s, sum_ref.shape)      # (8, Cout) slab
    m2_ref[...] = jnp.broadcast_to(m2, m2_ref.shape)


# --------- pass 2: recompute conv tile, fold BN affine, ReLU, store ----------
def conv_bn_relu_kernel(x_ref, w_ref, scale_ref, shift_ref, o_ref,
                        *, th, W, Cin, Cout):
    y = _conv_tile(x_ref, w_ref, th=th, W=W, Cin=Cin, Cout=Cout)
    o_ref[...] = jnp.maximum(y * scale_ref[...] + shift_ref[...], 0.0)


def conv_bn_relu(x_nchw, w_oihw, gamma, beta):
    """x_nchw: [N, Cin, H, W]; w_oihw: [Cout, Cin, 3, 3]; gamma/beta: [Cout]."""
    N, Cin, H, W = x_nchw.shape
    Cout = w_oihw.shape[0]
    Hp, Wp = H + 2, W + 2
    Cin_p = _round_up(Cin, 8)          # sublane-aligned contraction (zeros)

    # --- glue: NHWC + spatial pad (one cheap pass, ~input-sized), bf16 ---
    x_nhwc = jnp.transpose(x_nchw, (0, 2, 3, 1)).astype(jnp.bfloat16)
    xp = jnp.pad(x_nhwc, ((0, 0), (1, 1), (1, 1), (0, Cin_p - Cin)))
    w9 = jnp.transpose(w_oihw, (2, 3, 1, 0)).reshape(9, Cin, Cout)
    w9 = jnp.pad(w9, ((0, 0), (0, Cin_p - Cin), (0, 0))).astype(jnp.bfloat16)

    th = _pick_tile_h(N, H, W)
    HB = H // th
    rows = th * W                       # output rows per grid step (mult of 8)
    T = N * HB                          # total grid steps (>=2 when possible)
    M = N * H * W

    cparams = pltpu.CompilerParams(
        dimension_semantics=("parallel", "parallel"),
        vmem_limit_bytes=48 * 1024 * 1024,   # <= v7x 64 MiB; raisable on v5e/v6e
    )

    # Padded image resident across the row-block axis (fetched once per n).
    # If profiling showed exposed DMA, pipeline_mode=pl.Buffered(3) goes here.
    x_spec = pl.BlockSpec((1, Hp, Wp, Cin_p), lambda n, hb: (n, 0, 0, 0))
    w_spec = pl.BlockSpec((9, Cin_p, Cout), lambda n, hb: (0, 0, 0))

    # ---- pass 1: per-tile BN statistics only (tiny outputs) ----
    tsum, tm2 = pl.pallas_call(
        functools.partial(conv_stats_kernel, th=th, W=W, Cin=Cin_p, Cout=Cout),
        out_shape=(
            jax.ShapeDtypeStruct((T * 8, Cout), jnp.float32),
            jax.ShapeDtypeStruct((T * 8, Cout), jnp.float32),
        ),
        grid=(N, HB),
        in_specs=[x_spec, w_spec],
        out_specs=(
            pl.BlockSpec((8, Cout), lambda n, hb: (n * HB + hb, 0)),
            pl.BlockSpec((8, Cout), lambda n, hb: (n * HB + hb, 0)),
        ),
        compiler_params=cparams,
    )(xp, w9)

    # ---- combine per-tile stats (tiny [T, Cout]; stable Chan combine) ----
    tile_sum = tsum.reshape(T, 8, Cout)[:, 0, :]
    tile_m2 = tm2.reshape(T, 8, Cout)[:, 0, :]
    mean = jnp.sum(tile_sum, axis=0) / M                                   # [Cout]
    tile_mean = tile_sum / float(rows)
    var = (jnp.sum(tile_m2, axis=0)
           + float(rows) * jnp.sum((tile_mean - mean[None, :]) ** 2, axis=0)) / M
    scale = (gamma.astype(jnp.float32) * jax.lax.rsqrt(var + EPS)).reshape(1, Cout)
    shift = (beta.astype(jnp.float32) - mean * scale[0]).reshape(1, Cout)

    # ---- pass 2: recompute conv tile, apply folded BN affine + ReLU ----
    out_flat = pl.pallas_call(
        functools.partial(conv_bn_relu_kernel, th=th, W=W, Cin=Cin_p, Cout=Cout),
        out_shape=jax.ShapeDtypeStruct((M, Cout), jnp.float32),
        grid=(N, HB),
        in_specs=[
            x_spec, w_spec,
            pl.BlockSpec((1, Cout), lambda n, hb: (0, 0)),
            pl.BlockSpec((1, Cout), lambda n, hb: (0, 0)),
        ],
        out_specs=pl.BlockSpec((rows, Cout), lambda n, hb: (n * HB + hb, 0)),
        compiler_params=cparams,
    )(xp, w9, scale, shift)

    # NHWC-flat -> NCHW (PyTorch layout).
    out = out_flat.reshape(N, H, W, Cout)
    return jnp.transpose(out, (0, 3, 1, 2))


def reference(x_nchw, w_oihw, gamma, beta):
    """Pure-JAX f32 reference: conv -> train-mode BN -> ReLU."""
    y = jax.lax.conv_general_dilated(
        x_nchw, w_oihw, window_strides=(1, 1), padding=((1, 1), (1, 1)),
        dimension_numbers=("NCHW", "OIHW", "NCHW"),
    )
    mean = jnp.mean(y, axis=(0, 2, 3), keepdims=True)
    var = jnp.mean((y - mean) ** 2, axis=(0, 2, 3), keepdims=True)
    y_hat = (y - mean) * jax.lax.rsqrt(var + EPS)
    y_hat = y_hat * gamma.reshape(1, -1, 1, 1) + beta.reshape(1, -1, 1, 1)
    return jnp.maximum(y_hat, 0.0)


if __name__ == "__main__":
    key = jax.random.PRNGKey(0)
    N, Cin, H, W = 2, 4, 16, 16
    Cout = 8

    kx, kw = jax.random.split(key)
    x = jax.random.normal(kx, (N, Cin, H, W), dtype=jnp.float32)
    # Conv2d(bias=False) weight init (deterministic here).
    fan_in = Cin * 3 * 3
    bound = 1.0 / (fan_in ** 0.5)
    w = jax.random.uniform(kw, (Cout, Cin, 3, 3), dtype=jnp.float32,
                           minval=-bound, maxval=bound)
    # BatchNorm2d default affine init: weight=1, bias=0.
    gamma = jnp.ones((Cout,), dtype=jnp.float32)
    beta = jnp.zeros((Cout,), dtype=jnp.float32)

    out = jax.block_until_ready(conv_bn_relu(x, w, gamma, beta))
    ref = jax.block_until_ready(reference(x, w, gamma, beta))

    assert out.shape == (N, Cout, H, W)
    # bf16 MXU operands (per perf review) -> looser tolerance than the pure-f32
    # 1e-4 check; statistics and scale/shift math remain in f32.
    assert jnp.allclose(out, ref, rtol=5e-2, atol=5e-2), "mismatch vs reference"

    print("KERNEL_OK")
</pallas_src>

<mosaic_0001>
module attributes {stable_mosaic.version = 11 : i64} {
  func.func @conv_stats_kernel(%arg0: i32, %arg1: i32, %arg2: memref<1x18x18x8xbf16, #tpu.memory_space<vmem>>, %arg3: memref<9x8x8xbf16, #tpu.memory_space<vmem>>, %arg4: memref<8x8xf32, #tpu.memory_space<vmem>>, %arg5: memref<8x8xf32, #tpu.memory_space<vmem>>) attributes {dimension_semantics = [#tpu.dimension_semantics<parallel>, #tpu.dimension_semantics<parallel>], iteration_bounds = array<i64: 2, 1>, scalar_prefetch = 0 : i64, scratch_operands = 0 : i64, tpu.core_type = #tpu.core_type<tc>, window_params = [{transform_indices = @transform_0, window_bounds = array<i64: 1, 18, 18, 8>}, {pipeline_mode = #tpu.pipeline_mode<synchronous>, transform_indices = @transform_1, window_bounds = array<i64: 9, 8, 8>}, {transform_indices = @transform_2, window_bounds = array<i64: 8, 8>}, {transform_indices = @transform_3, window_bounds = array<i64: 8, 8>}]} {
    %c16_i32 = arith.constant 16 : i32
    %0 = arith.muli %arg1, %c16_i32 : i32
    %c0 = arith.constant 0 : index
    %1 = arith.index_cast %0 : i32 to index
    %c0_0 = arith.constant 0 : index
    %c0_1 = arith.constant 0 : index
    %2 = vector.load %arg2[%c0, %1, %c0_0, %c0_1] : memref<1x18x18x8xbf16, #tpu.memory_space<vmem>>, vector<1x18x18x8xbf16>
    %3 = vector.shape_cast %2 : vector<1x18x18x8xbf16> to vector<18x18x8xbf16>
    %cst = arith.constant 0.000000e+00 : f32
    %4 = vector.broadcast %cst : f32 to vector<256x8xf32>
    %5 = vector.extract_strided_slice %3 {offsets = [0, 0, 0], sizes = [16, 16, 8], strides = [1, 1, 1]} : vector<18x18x8xbf16> to vector<16x16x8xbf16>
    %6 = vector.shape_cast %5 : vector<16x16x8xbf16> to vector<256x8xbf16>
    %c0_2 = arith.constant 0 : index
    %c0_3 = arith.constant 0 : index
    %c0_4 = arith.constant 0 : index
    %7 = vector.load %arg3[%c0_2, %c0_3, %c0_4] : memref<9x8x8xbf16, #tpu.memory_space<vmem>>, vector<1x8x8xbf16>
    %8 = vector.shape_cast %7 : vector<1x8x8xbf16> to vector<8x8xbf16>
    %cst_5 = arith.constant dense<0.000000e+00> : vector<256x8xf32>
    %9 = tpu.matmul %6, %8, %cst_5 {dimension_numbers = #tpu.dot_dimension_numbers<[1], [0], [0], [1], [0, 0, 1, 1], [], []>} : vector<256x8xbf16>, vector<8x8xbf16>, vector<256x8xf32> -> vector<256x8xf32>
    %10 = arith.addf %4, %9 : vector<256x8xf32>
    %11 = vector.extract_strided_slice %3 {offsets = [0, 1, 0], sizes = [16, 16, 8], strides = [1, 1, 1]} : vector<18x18x8xbf16> to vector<16x16x8xbf16>
    %12 = vector.shape_cast %11 : vector<16x16x8xbf16> to vector<256x8xbf16>
    %c1 = arith.constant 1 : index
    %c0_6 = arith.constant 0 : index
    %c0_7 = arith.constant 0 : index
    %13 = vector.load %arg3[%c1, %c0_6, %c0_7] : memref<9x8x8xbf16, #tpu.memory_space<vmem>>, vector<1x8x8xbf16>
    %14 = vector.shape_cast %13 : vector<1x8x8xbf16> to vector<8x8xbf16>
    %cst_8 = arith.constant dense<0.000000e+00> : vector<256x8xf32>
    %15 = tpu.matmul %12, %14, %cst_8 {dimension_numbers = #tpu.dot_dimension_numbers<[1], [0], [0], [1], [0, 0, 1, 1], [], []>} : vector<256x8xbf16>, vector<8x8xbf16>, vector<256x8xf32> -> vector<256x8xf32>
    %16 = arith.addf %10, %15 : vector<256x8xf32>
    %17 = vector.extract_strided_slice %3 {offsets = [0, 2, 0], sizes = [16, 16, 8], strides = [1, 1, 1]} : vector<18x18x8xbf16> to vector<16x16x8xbf16>
    %18 = vector.shape_cast %17 : vector<16x16x8xbf16> to vector<256x8xbf16>
    %c2 = arith.constant 2 : index
    %c0_9 = arith.constant 0 : index
    %c0_10 = arith.constant 0 : index
    %19 = vector.load %arg3[%c2, %c0_9, %c0_10] : memref<9x8x8xbf16, #tpu.memory_space<vmem>>, vector<1x8x8xbf16>
    %20 = vector.shape_cast %19 : vector<1x8x8xbf16> to vector<8x8xbf16>
    %cst_11 = arith.constant dense<0.000000e+00> : vector<256x8xf32>
    %21 = tpu.matmul %18, %20, %cst_11 {dimension_numbers = #tpu.dot_dimension_numbers<[1], [0], [0], [1], [0, 0, 1, 1], [], []>} : vector<256x8xbf16>, vector<8x8xbf16>, vector<256x8xf32> -> vector<256x8xf32>
    %22 = arith.addf %16, %21 : vector<256x8xf32>
    %23 = vector.extract_strided_slice %3 {offsets = [1, 0, 0], sizes = [16, 16, 8], strides = [1, 1, 1]} : vector<18x18x8xbf16> to vector<16x16x8xbf16>
    %24 = vector.shape_cast %23 : vector<16x16x8xbf16> to vector<256x8xbf16>
    %c3 = arith.constant 3 : index
    %c0_12 = arith.constant 0 : index
    %c0_13 = arith.constant 0 : index
    %25 = vector.load %arg3[%c3, %c0_12, %c0_13] : memref<9x8x8xbf16, #tpu.memory_space<vmem>>, vector<1x8x8xbf16>
    %26 = vector.shape_cast %25 : vector<1x8x8xbf16> to vector<8x8xbf16>
    %cst_14 = arith.constant dense<0.000000e+00> : vector<256x8xf32>
    %27 = tpu.matmul %24, %26, %cst_14 {dimension_numbers = #tpu.dot_dimension_numbers<[1], [0], [0], [1], [0, 0, 1, 1], [], []>} : vector<256x8xbf16>, vector<8x8xbf16>, vector<256x8xf32> -> vector<256x8xf32>
    %28 = arith.addf %22, %27 : vector<256x8xf32>
    %29 = vector.extract_strided_slice %3 {offsets = [1, 1, 0], sizes = [16, 16, 8], strides = [1, 1, 1]} : vector<18x18x8xbf16> to vector<16x16x8xbf16>
    %30 = vector.shape_cast %29 : vector<16x16x8xbf16> to vector<256x8xbf16>
    %c4 = arith.constant 4 : index
    %c0_15 = arith.constant 0 : index
    %c0_16 = arith.constant 0 : index
    %31 = vector.load %arg3[%c4, %c0_15, %c0_16] : memref<9x8x8xbf16, #tpu.memory_space<vmem>>, vector<1x8x8xbf16>
    %32 = vector.shape_cast %31 : vector<1x8x8xbf16> to vector<8x8xbf16>
    %cst_17 = arith.constant dense<0.000000e+00> : vector<256x8xf32>
    %33 = tpu.matmul %30, %32, %cst_17 {dimension_numbers = #tpu.dot_dimension_numbers<[1], [0], [0], [1], [0, 0, 1, 1], [], []>} : vector<256x8xbf16>, vector<8x8xbf16>, vector<256x8xf32> -> vector<256x8xf32>
    %34 = arith.addf %28, %33 : vector<256x8xf32>
    %35 = vector.extract_strided_slice %3 {offsets = [1, 2, 0], sizes = [16, 16, 8], strides = [1, 1, 1]} : vector<18x18x8xbf16> to vector<16x16x8xbf16>
    %36 = vector.shape_cast %35 : vector<16x16x8xbf16> to vector<256x8xbf16>
    %c5 = arith.constant 5 : index
    %c0_18 = arith.constant 0 : index
    %c0_19 = arith.constant 0 : index
    %37 = vector.load %arg3[%c5, %c0_18, %c0_19] : memref<9x8x8xbf16, #tpu.memory_space<vmem>>, vector<1x8x8xbf16>
    %38 = vector.shape_cast %37 : vector<1x8x8xbf16> to vector<8x8xbf16>
    %cst_20 = arith.constant dense<0.000000e+00> : vector<256x8xf32>
    %39 = tpu.matmul %36, %38, %cst_20 {dimension_numbers = #tpu.dot_dimension_numbers<[1], [0], [0], [1], [0, 0, 1, 1], [], []>} : vector<256x8xbf16>, vector<8x8xbf16>, vector<256x8xf32> -> vector<256x8xf32>
    %40 = arith.addf %34, %39 : vector<256x8xf32>
    %41 = vector.extract_strided_slice %3 {offsets = [2, 0, 0], sizes = [16, 16, 8], strides = [1, 1, 1]} : vector<18x18x8xbf16> to vector<16x16x8xbf16>
    %42 = vector.shape_cast %41 : vector<16x16x8xbf16> to vector<256x8xbf16>
    %c6 = arith.constant 6 : index
    %c0_21 = arith.constant 0 : index
    %c0_22 = arith.constant 0 : index
    %43 = vector.load %arg3[%c6, %c0_21, %c0_22] : memref<9x8x8xbf16, #tpu.memory_space<vmem>>, vector<1x8x8xbf16>
    %44 = vector.shape_cast %43 : vector<1x8x8xbf16> to vector<8x8xbf16>
    %cst_23 = arith.constant dense<0.000000e+00> : vector<256x8xf32>
    %45 = tpu.matmul %42, %44, %cst_23 {dimension_numbers = #tpu.dot_dimension_numbers<[1], [0], [0], [1], [0, 0, 1, 1], [], []>} : vector<256x8xbf16>, vector<8x8xbf16>, vector<256x8xf32> -> vector<256x8xf32>
    %46 = arith.addf %40, %45 : vector<256x8xf32>
    %47 = vector.extract_strided_slice %3 {offsets = [2, 1, 0], sizes = [16, 16, 8], strides = [1, 1, 1]} : vector<18x18x8xbf16> to vector<16x16x8xbf16>
    %48 = vector.shape_cast %47 : vector<16x16x8xbf16> to vector<256x8xbf16>
    %c7 = arith.constant 7 : index
    %c0_24 = arith.constant 0 : index
    %c0_25 = arith.constant 0 : index
    %49 = vector.load %arg3[%c7, %c0_24, %c0_25] : memref<9x8x8xbf16, #tpu.memory_space<vmem>>, vector<1x8x8xbf16>
    %50 = vector.shape_cast %49 : vector<1x8x8xbf16> to vector<8x8xbf16>
    %cst_26 = arith.constant dense<0.000000e+00> : vector<256x8xf32>
    %51 = tpu.matmul %48, %50, %cst_26 {dimension_numbers = #tpu.dot_dimension_numbers<[1], [0], [0], [1], [0, 0, 1, 1], [], []>} : vector<256x8xbf16>, vector<8x8xbf16>, vector<256x8xf32> -> vector<256x8xf32>
    %52 = arith.addf %46, %51 : vector<256x8xf32>
    %53 = vector.extract_strided_slice %3 {offsets = [2, 2, 0], sizes = [16, 16, 8], strides = [1, 1, 1]} : vector<18x18x8xbf16> to vector<16x16x8xbf16>
    %54 = vector.shape_cast %53 : vector<16x16x8xbf16> to vector<256x8xbf16>
    %c8 = arith.constant 8 : index
    %c0_27 = arith.constant 0 : index
    %c0_28 = arith.constant 0 : index
    %55 = vector.load %arg3[%c8, %c0_27, %c0_28] : memref<9x8x8xbf16, #tpu.memory_space<vmem>>, vector<1x8x8xbf16>
    %56 = vector.shape_cast %55 : vector<1x8x8xbf16> to vector<8x8xbf16>
    %cst_29 = arith.constant dense<0.000000e+00> : vector<256x8xf32>
    %57 = tpu.matmul %54, %56, %cst_29 {dimension_numbers = #tpu.dot_dimension_numbers<[1], [0], [0], [1], [0, 0, 1, 1], [], []>} : vector<256x8xbf16>, vector<8x8xbf16>, vector<256x8xf32> -> vector<256x8xf32>
    %58 = arith.addf %52, %57 : vector<256x8xf32>
    %cst_30 = arith.constant dense<0.000000e+00> : vector<8xf32>
    %59 = vector.multi_reduction <add>, %58, %cst_30 [0] : vector<256x8xf32> to vector<8xf32>
    %60 = vector.shape_cast %59 : vector<8xf32> to vector<1x8xf32>
    %cst_31 = arith.constant 3.906250e-03 : f32
    %61 = vector.broadcast %cst_31 : f32 to vector<1x8xf32>
    %62 = arith.mulf %60, %61 : vector<1x8xf32>
    %63 = vector.broadcast %62 : vector<1x8xf32> to vector<256x8xf32>
    %64 = arith.subf %58, %63 : vector<256x8xf32>
    %65 = arith.mulf %64, %64 : vector<256x8xf32>
    %cst_32 = arith.constant dense<0.000000e+00> : vector<8xf32>
    %66 = vector.multi_reduction <add>, %65, %cst_32 [0] : vector<256x8xf32> to vector<8xf32>
    %67 = vector.shape_cast %66 : vector<8xf32> to vector<1x8xf32>
    %68 = vector.shape_cast %60 : vector<1x8xf32> to vector<1x8xf32>
    %69 = vector.broadcast %68 : vector<1x8xf32> to vector<8x8xf32>
    %c0_33 = arith.constant 0 : index
    %c0_34 = arith.constant 0 : index
    %70 = vector.load %arg4[%c0_33, %c0_34] : memref<8x8xf32, #tpu.memory_space<vmem>>, vector<8x8xf32>
    tpu.vector_store %arg4[%c0_33, %c0_34], %69 {strides = array<i32>} : memref<8x8xf32, #tpu.memory_space<vmem>>, vector<8x8xf32>,
    %71 = vector.shape_cast %67 : vector<1x8xf32> to vector<1x8xf32>
    %72 = vector.broadcast %71 : vector<1x8xf32> to vector<8x8xf32>
    %c0_35 = arith.constant 0 : index
    %c0_36 = arith.constant 0 : index
    %73 = vector.load %arg5[%c0_35, %c0_36] : memref<8x8xf32, #tpu.memory_space<vmem>>, vector<8x8xf32>
    tpu.vector_store %arg5[%c0_35, %c0_36], %72 {strides = array<i32>} : memref<8x8xf32, #tpu.memory_space<vmem>>, vector<8x8xf32>,
    return
  }
  func.func @transform_0(%arg0: i32, %arg1: i32) -> (i32, i32, i32, i32) {
    %c0_i32 = arith.constant 0 : i32
    %c0_i32_0 = arith.constant 0 : i32
    %c0_i32_1 = arith.constant 0 : i32
    %c0_i32_2 = arith.constant 0 : i32
    return %arg0, %c0_i32, %c0_i32_0, %c0_i32_1 : i32, i32, i32, i32
  }
  func.func @transform_1(%arg0: i32, %arg1: i32) -> (i32, i32, i32) {
    %c0_i32 = arith.constant 0 : i32
    %c0_i32_0 = arith.constant 0 : i32
    %c0_i32_1 = arith.constant 0 : i32
    %c0_i32_2 = arith.constant 0 : i32
    return %c0_i32, %c0_i32_0, %c0_i32_1 : i32, i32, i32
  }
  func.func @transform_2(%arg0: i32, %arg1: i32) -> (i32, i32) {
    %c1_i32 = arith.constant 1 : i32
    %0 = arith.muli %arg0, %c1_i32 : i32
    %1 = arith.addi %0, %arg1 : i32
    %c0_i32 = arith.constant 0 : i32
    %c0_i32_0 = arith.constant 0 : i32
    return %1, %c0_i32 : i32, i32
  }
  func.func @transform_3(%arg0: i32, %arg1: i32) -> (i32, i32) {
    %c1_i32 = arith.constant 1 : i32
    %0 = arith.muli %arg0, %c1_i32 : i32
    %1 = arith.addi %0, %arg1 : i32
    %c0_i32 = arith.constant 0 : i32
    %c0_i32_0 = arith.constant 0 : i32
    return %1, %c0_i32 : i32, i32
  }
}

</mosaic_0001>

<llo_original>
// kernel: tpu_custom_call.1
$region0: #{tpu_custom_call.1}
  #allocation0 [shape = 'u32[]', space=smem, size = 0x4, offset = 0x4, fixed_abs, tag = 'smem constant byte address 0x4 - core index']
  #allocation1 [shape = 'u32[144,128]{1,0:T(1,128)}', space=vmem, size = 0x12000, scoped, tag = 'internal scratch']
  %s0 = inlined_call_operand.vmem [shape: bf16[2,18,18,8], index: 0, kind: input, shape index: {}]
  %s1 = inlined_call_operand.vmem [shape: bf16[9,8,8], index: 1, kind: input, shape index: {}]
  %s2 = inlined_call_operand.vmem [shape: f32[16,8], index: 2, kind: output, shape index: {0}]
  %s3 = inlined_call_operand.vmem [shape: f32[16,8], index: 3, kind: output, shape index: {1}]
  %4 = xla_tuple %s2, %s3
  %s5 = sld [smem:[#allocation0]]
  $region49: #{tpu_custom_call.1} parent=0
    _
  %s7 = ssub.s32 1, %s5
  %s8 = scalar_select 0, %s7, %s5
  loop: start=0, step=1, limit=4
  $region2: #{tpu_custom_call.1} parent=0 // loop_pre_header
    _
  $region3: #{tpu_custom_call.1} parent=0 // loop_header
    %s10 = sphi 0, %s14
    %p11 = scmp.ge.s32.totalorder %s10, 4
    %s17 = sphi 0, %s29
    %s18 = sphi 0, %s25
    %s19 = sphi 0, %s17
    %s20 = sphi 0, %s18
    %s21 = sphi 0, %s19
    %s22 = sphi 0, %s20
    %s32 = sphi 0, %s34
    %s35 = sphi 0, %s32
    %s36 = sphi 0, %s35
    %s52 = sphi 0, %s36
    %s56 = sphi 0, %s56
    %s58 = sphi 0, %s56
    %s59 = sphi 0, %s58
    %s73 = sphi 0, %s59
    %s81 = sphi 0, %s83
    %s84 = sphi 0, %s81
    %s85 = sphi 0, %s84
    %s101 = sphi 0, %s85
    %s109 = sphi 0, %s111
    %s112 = sphi 0, %s109
    %s113 = sphi 0, %s112
    %s129 = sphi 0, %s113
  $region4: #{tpu_custom_call.1} parent=0 // loop_header_branch
    %13 = sbr.rel (%p11) target = $region8
  $region5: #{tpu_custom_call.1} parent=0 // loop_body
    %s15 = ssub.s32 %s10, 1
    %s16 = ssub.s32 %s10, 2
    %s23 = sadd.s32 1, %s18
    %p24 = scmp.ge.s32.totalorder %s23, 1
    %s25 = scalar_select %p24, 0, %s23
    %s26 = sadd.s32 1, %s17
    %s27 = scalar_select %p24, %s26, %s17
    %p28 = scmp.ge.s32.totalorder %s27, 2
    %s29 = scalar_select %p28, 0, %s27
    %s30 = ssub.s32 %s17, %s29
    %p31 = scmp.eq.s32.totalorder %s30, 0
    %s33 = sadd.s32 %s32, 1
    %s34 = scalar_select %p31, %s32, %s33
    %p37 = pneg %p31
    %p38 = scmp.eq.s32.totalorder %s10, 1
    %p39 = por %p37, %p38
    %p40 = scmp.ne.s32.totalorder %s32, %s35
    %p41 = scmp.eq.s32.totalorder %s10, 0
    %p42 = por %p40, %p41
    %p43 = scmp.ne.s32.totalorder %s32, %s35
    %p44 = scmp.eq.s32.totalorder %s15, 1
    %p45 = por %p43, %p44
    %p46 = scmp.ne.s32.totalorder %s35, %s36
    %p47 = scmp.eq.s32.totalorder %s15, 0
    %p48 = por %p46, %p47
    %p49 = scmp.ne.s32.totalorder %s35, %s36
    %p50 = scmp.eq.s32.totalorder %s16, 1
    %p51 = por %p49, %p50
    %p53 = scmp.ne.s32.totalorder %s36, %s52
    %p54 = scmp.eq.s32.totalorder %s16, 0
    %p55 = por %p53, %p54
    %s57 = sadd.s32 %s56, 1
    %p60 = scmp.eq.s32.totalorder %s10, 1
    %p61 = scmp.ne.s32.totalorder %s56, %s58
    %p62 = scmp.eq.s32.totalorder %s10, 0
    %p63 = por %p61, %p62
    %p64 = scmp.ne.s32.totalorder %s56, %s58
    %p65 = scmp.eq.s32.totalorder %s15, 1
    %p66 = por %p64, %p65
    %p67 = scmp.ne.s32.totalorder %s58, %s59
    %p68 = scmp.eq.s32.totalorder %s15, 0
    %p69 = por %p67, %p68
    %p70 = scmp.ne.s32.totalorder %s58, %s59
    %p71 = scmp.eq.s32.totalorder %s16, 1
    %p72 = por %p70, %p71
    %p74 = scmp.ne.s32.totalorder %s59, %s73
    %p75 = scmp.eq.s32.totalorder %s16, 0
    %p76 = por %p74, %p75
    %s77 = sadd.s32 %s17, %s18
    %s78 = sadd.s32 %s29, %s25
    %s79 = ssub.s32 %s77, %s78
    %p80 = scmp.eq.s32.totalorder %s79, 0
    %s82 = sadd.s32 %s81, 1
    %s83 = scalar_select %p80, %s81, %s82
    %p86 = pneg %p80
    %p87 = scmp.eq.s32.totalorder %s10, 1
    %p88 = por %p86, %p87
    %p89 = scmp.ne.s32.totalorder %s81, %s84
    %p90 = scmp.eq.s32.totalorder %s10, 0
    %p91 = por %p89, %p90
    %p92 = scmp.ne.s32.totalorder %s81, %s84
    %p93 = scmp.eq.s32.totalorder %s15, 1
    %p94 = por %p92, %p93
    %p95 = scmp.ne.s32.totalorder %s84, %s85
    %p96 = scmp.eq.s32.totalorder %s15, 0
    %p97 = por %p95, %p96
    %p98 = scmp.ne.s32.totalorder %s84, %s85
    %p99 = scmp.eq.s32.totalorder %s16, 1
    %p100 = por %p98, %p99
    %p102 = scmp.ne.s32.totalorder %s85, %s101
    %p103 = scmp.eq.s32.totalorder %s16, 0
    %p104 = por %p102, %p103
    %s105 = sadd.s32 %s17, %s18
    %s106 = sadd.s32 %s29, %s25
    %s107 = ssub.s32 %s105, %s106
    %p108 = scmp.eq.s32.totalorder %s107, 0
    %s110 = sadd.s32 %s109, 1
    %s111 = scalar_select %p108, %s109, %s110
    %p114 = pneg %p108
    %p115 = scmp.eq.s32.totalorder %s10, 1
    %p116 = por %p114, %p115
    %p117 = scmp.ne.s32.totalorder %s109, %s112
    %p118 = scmp.eq.s32.totalorder %s10, 0
    %p119 = por %p117, %p118
    %p120 = scmp.ne.s32.totalorder %s109, %s112
    %p121 = scmp.eq.s32.totalorder %s15, 1
    %p122 = por %p120, %p121
    %p123 = scmp.ne.s32.totalorder %s112, %s113
    %p124 = scmp.eq.s32.totalorder %s15, 0
    %p125 = por %p123, %p124
    %p126 = scmp.ne.s32.totalorder %s112, %s113
    %p127 = scmp.eq.s32.totalorder %s16, 1
    %p128 = por %p126, %p127
    %p130 = scmp.ne.s32.totalorder %s113, %s129
    %p131 = scmp.eq.s32.totalorder %s16, 0
    %p132 = por %p130, %p131
    %p133 = scmp.le.s32.totalorder 1, %s10
    %p134 = scmp.lt.s32.totalorder %s10, 3
    %p135 = pnand %p133, %p134
    %p136 = pneg %p135
    // Predicated region
    $region9: #{tpu_custom_call.1} parent=5 // pred_check
      _
    $region10: #{tpu_custom_call.1} parent=5 // pred_check_branch
      %138 = sbr.rel (%p135) target = $region12
    $region11: #{tpu_custom_call.1} parent=5 // pred_region
      %s139 = ssub.s32 %s10, 1
      // Predicated region
      $region13: #{tpu_custom_call.1} parent=11 // pred_check
        %p140 = pneg %p69
      $region14: #{tpu_custom_call.1} parent=11 // pred_check_branch
        %142 = sbr.rel (%p140) target = $region16
      $region15: #{tpu_custom_call.1} parent=11 // pred_region
        _
      $region16: #{tpu_custom_call.1} parent=11 // pred_fallthru
        _
    $region12: #{tpu_custom_call.1} parent=5 // pred_fallthru
      _
    %p143 = scmp.lt.s32.totalorder %s10, 2
    // Predicated region
    $region17: #{tpu_custom_call.1} parent=5 // pred_check
      %p144 = pneg %p143
    $region18: #{tpu_custom_call.1} parent=5 // pred_check_branch
      %146 = sbr.rel (%p144) target = $region20
    $region19: #{tpu_custom_call.1} parent=5 // pred_region
      // Predicated region
      $region21: #{tpu_custom_call.1} parent=19 // pred_check
        %p147 = pneg %p42
      $region22: #{tpu_custom_call.1} parent=19 // pred_check_branch
        %149 = sbr.rel (%p147) target = $region24
      $region23: #{tpu_custom_call.1} parent=19 // pred_region
        %p150 = scmp.lt.s32.totalorder %s17, 1
        %s151 = scalar_select %p150, %s17, 1
        %s152 = smul.addr %s151, 54
        %s153 = smul.addr %s152, 4
        %s154 = scalar_lea.vmem %s0, %s153
      $region24: #{tpu_custom_call.1} parent=19 // pred_fallthru
        _
    $region20: #{tpu_custom_call.1} parent=5 // pred_fallthru
      _
    %p155 = scmp.le.s32.totalorder 1, %s10
    %p156 = scmp.lt.s32.totalorder %s10, 3
    %p157 = pnand %p155, %p156
    %p158 = pneg %p157
    // Predicated region
    $region25: #{tpu_custom_call.1} parent=5 // pred_check
      _
    $region26: #{tpu_custom_call.1} parent=5 // pred_check_branch
      %160 = sbr.rel (%p157) target = $region28
    $region27: #{tpu_custom_call.1} parent=5 // pred_region
      %s161 = ssub.s32 %s10, 1
      %p162 = scmp.lt.s32.totalorder %s19, 1
      %s163 = scalar_select %p162, %s19, 1
      %s164 = smul.addr %s163, 54
      %s165 = smul.addr %s164, 4
      %s166 = scalar_lea.vmem %s0, %s165
      %p167 = pneg %p48
      %p168 = pneg %p45
      %p169 = pneg %p69
      %p170 = pneg %p66
      %p171 = pneg %p97
      %p172 = pneg %p94
      %s173 = sadd.s32 %s19, %s20
      %p174 = scmp.lt.s32.totalorder %s173, 1
      %s175 = scalar_select %p174, %s173, 1
      %s176 = smul.addr %s175, 8
      %s177 = scalar_lea.vmem %s2, %s176
      %p178 = pneg %p125
      %p179 = pneg %p122
      %s180 = sadd.s32 %s19, %s20
      %p181 = scmp.lt.s32.totalorder %s180, 1
      %s182 = scalar_select %p181, %s180, 1
      %s183 = smul.addr %s182, 8
      %s184 = scalar_lea.vmem %s3, %s183
      %p185 = scmp.lt.s32.totalorder %s19, 1
      %s186 = scalar_select %p185, %s19, 1
      %s187 = smul.addr %s186, 54
      %s188 = smul.addr %s187, 4
      %s189 = scalar_lea.vmem %s0, %s188
      %s190 = sadd.s32 %s19, %s20
      %p191 = scmp.lt.s32.totalorder %s190, 1
      %s192 = scalar_select %p191, %s190, 1
      %s193 = smul.addr %s192, 8
      %s194 = scalar_lea.vmem %s2, %s193
      %s195 = sadd.s32 %s19, %s20
      %s196 = sadd.s32 %s19, %s20
      %p197 = scmp.lt.s32.totalorder %s196, 1
      %s198 = scalar_select %p197, %s196, 1
      %s199 = smul.addr %s198, 8
      %s200 = scalar_lea.vmem %s3, %s199
      %s201 = sadd.s32 %s19, %s20
      %s203 = smul.u32 %s20, 16
      %s204 = smul.u32 %s203, 3
      %s205 = smul.addr %s204, 4
      %s206 = scalar_lea.vmem %s189, %s205
      %v207 = vld [vmem:[%s206] sm:$0xf]
      %v208 = vld [vmem:[%s206 + $0x4] sm:$0xf]
      %v209 = vld [vmem:[%s206 + $0x8] sm:$0x1]
      %v210 = vld [vmem:[%s206 + $0xc] sm:$0xf]
      %v211 = vld [vmem:[%s206 + $0x10] sm:$0xf]
      %v212 = vld [vmem:[%s206 + $0x14] sm:$0x1]
      %v213 = vld [vmem:[%s206 + $0x18] sm:$0xf]
      %v214 = vld [vmem:[%s206 + $0x1c] sm:$0xf]
      %v215 = vld [vmem:[%s206 + $0x20] sm:$0x1]
      %v216 = vld [vmem:[%s206 + $0x24] sm:$0xf]
      %v217 = vld [vmem:[%s206 + $0x28] sm:$0xf]
      %v218 = vld [vmem:[%s206 + $0x2c] sm:$0x1]
      %v219 = vld [vmem:[%s206 + $0x30] sm:$0xf]
      %v220 = vld [vmem:[%s206 + $0x34] sm:$0xf]
      %v221 = vld [vmem:[%s206 + $0x38] sm:$0x1]
      %v222 = vld [vmem:[%s206 + $0x3c] sm:$0xf]
      %v223 = vld [vmem:[%s206 + $0x40] sm:$0xf]
      %v224 = vld [vmem:[%s206 + $0x44] sm:$0x1]
      %v225 = vld [vmem:[%s206 + $0x48] sm:$0xf]
      %v226 = vld [vmem:[%s206 + $0x4c] sm:$0xf]
      %v227 = vld [vmem:[%s206 + $0x50] sm:$0x1]
      %v228 = vld [vmem:[%s206 + $0x54] sm:$0xf]
      %v229 = vld [vmem:[%s206 + $0x58] sm:$0xf]
      %v230 = vld [vmem:[%s206 + $0x5c] sm:$0x1]
      %v231 = vld [vmem:[%s206 + $0x60] sm:$0xf]
      %v232 = vld [vmem:[%s206 + $0x64] sm:$0xf]
      %v233 = vld [vmem:[%s206 + $0x68] sm:$0x1]
      %v234 = vld [vmem:[%s206 + $0x6c] sm:$0xf]
      %v235 = vld [vmem:[%s206 + $0x70] sm:$0xf]
      %v236 = vld [vmem:[%s206 + $0x74] sm:$0x1]
      %v237 = vld [vmem:[%s206 + $0x78] sm:$0xf]
      %v238 = vld [vmem:[%s206 + $0x7c] sm:$0xf]
      %v239 = vld [vmem:[%s206 + $0x80] sm:$0x1]
      %v240 = vld [vmem:[%s206 + $0x84] sm:$0xf]
      %v241 = vld [vmem:[%s206 + $0x88] sm:$0xf]
      %v242 = vld [vmem:[%s206 + $0x8c] sm:$0x1]
      %v243 = vld [vmem:[%s206 + $0x90] sm:$0xf]
      %v244 = vld [vmem:[%s206 + $0x94] sm:$0xf]
      %v245 = vld [vmem:[%s206 + $0x98] sm:$0x1]
      %v246 = vld [vmem:[%s206 + $0x9c] sm:$0xf]
      %v247 = vld [vmem:[%s206 + $0xa0] sm:$0xf]
      %v248 = vld [vmem:[%s206 + $0xa4] sm:$0x1]
      %v249 = vld [vmem:[%s206 + $0xa8] sm:$0xf]
      %v250 = vld [vmem:[%s206 + $0xac] sm:$0xf]
      %v251 = vld [vmem:[%s206 + $0xb0] sm:$0x1]
      %v252 = vld [vmem:[%s206 + $0xb4] sm:$0xf]
      %v253 = vld [vmem:[%s206 + $0xb8] sm:$0xf]
      %v254 = vld [vmem:[%s206 + $0xbc] sm:$0x1]
      %v255 = vld [vmem:[%s206 + $0xc0] sm:$0xf]
      %v256 = vld [vmem:[%s206 + $0xc4] sm:$0xf]
      %v257 = vld [vmem:[%s206 + $0xc8] sm:$0x1]
      %v258 = vld [vmem:[%s206 + $0xcc] sm:$0xf]
      %v259 = vld [vmem:[%s206 + $0xd0] sm:$0xf]
      %v260 = vld [vmem:[%s206 + $0xd4] sm:$0x1]
      %v261 = vld [vmem:[%s1] sm:$0xf]
      %vm262 = vsmask.f32 3328
      %vm263 = vsmask.f32 7440
      %vm264 = vmor %vm262, %vm263
      %v266 = vshrl.u32 %v207, 16
      %v268 = vrot.slane %v266, 4
      %v269 = vshll.u32 %v207, 16
      %v271 = vrot.slane %v269, 5
      %v272 = vor.u32 %v268, %v271
      %v273 = vrot.slane %v272, 4
      %v275 = vshll.u32 %v208, 16
      %v277 = vrot.slane %v275, 5
      %v278 = vsel %vm264, %v273, %v277
      %v279 = vshrl.u32 %v208, 16
      %v281 = vrot.slane %v279, 4
      %v282 = vor.u32 %v281, %v277
      %v283 = vrot.slane %v282, 4
      %v285 = vshll.u32 %v209, 16
      %v287 = vrot.slane %v285, 5
      %v288 = vsel %vm264, %v283, %v287
      %v290 = vshrl.u32 %v210, 16
      %v292 = vrot.slane %v290, 4
      %v293 = vshll.u32 %v210, 16
      %v295 = vrot.slane %v293, 5
      %v296 = vor.u32 %v292, %v295
      %v297 = vrot.slane %v296, 4
      %v299 = vshll.u32 %v211, 16
      %v301 = vrot.slane %v299, 5
      %v302 = vsel %vm264, %v297, %v301
      %v303 = vshrl.u32 %v211, 16
      %v305 = vrot.slane %v303, 4
      %v306 = vor.u32 %v305, %v301
      %v307 = vrot.slane %v306, 4
      %v309 = vshll.u32 %v212, 16
      %v311 = vrot.slane %v309, 5
      %v312 = vsel %vm264, %v307, %v311
      %v314 = vshrl.u32 %v213, 16
      %v316 = vrot.slane %v314, 4
      %v317 = vshll.u32 %v213, 16
      %v319 = vrot.slane %v317, 5
      %v320 = vor.u32 %v316, %v319
      %v321 = vrot.slane %v320, 4
      %v323 = vshll.u32 %v214, 16
      %v325 = vrot.slane %v323, 5
      %v326 = vsel %vm264, %v321, %v325
      %v327 = vshrl.u32 %v214, 16
      %v329 = vrot.slane %v327, 4
      %v330 = vor.u32 %v329, %v325
      %v331 = vrot.slane %v330, 4
      %v333 = vshll.u32 %v215, 16
      %v335 = vrot.slane %v333, 5
      %v336 = vsel %vm264, %v331, %v335
      %v338 = vshrl.u32 %v216, 16
      %v340 = vrot.slane %v338, 4
      %v341 = vshll.u32 %v216, 16
      %v343 = vrot.slane %v341, 5
      %v344 = vor.u32 %v340, %v343
      %v345 = vrot.slane %v344, 4
      %v347 = vshll.u32 %v217, 16
      %v349 = vrot.slane %v347, 5
      %v350 = vsel %vm264, %v345, %v349
      %v351 = vshrl.u32 %v217, 16
      %v353 = vrot.slane %v351, 4
      %v354 = vor.u32 %v353, %v349
      %v355 = vrot.slane %v354, 4
      %v357 = vshll.u32 %v218, 16
      %v359 = vrot.slane %v357, 5
      %v360 = vsel %vm264, %v355, %v359
      %v362 = vshrl.u32 %v219, 16
      %v364 = vrot.slane %v362, 4
      %v365 = vshll.u32 %v219, 16
      %v367 = vrot.slane %v365, 5
      %v368 = vor.u32 %v364, %v367
      %v369 = vrot.slane %v368, 4
      %v371 = vshll.u32 %v220, 16
      %v373 = vrot.slane %v371, 5
      %v374 = vsel %vm264, %v369, %v373
      %v375 = vshrl.u32 %v220, 16
      %v377 = vrot.slane %v375, 4
      %v378 = vor.u32 %v377, %v373
      %v379 = vrot.slane %v378, 4
      %v381 = vshll.u32 %v221, 16
      %v383 = vrot.slane %v381, 5
      %v384 = vsel %vm264, %v379, %v383
      %v386 = vshrl.u32 %v222, 16
      %v388 = vrot.slane %v386, 4
      %v389 = vshll.u32 %v222, 16
      %v391 = vrot.slane %v389, 5
      %v392 = vor.u32 %v388, %v391
      %v393 = vrot.slane %v392, 4
      %v395 = vshll.u32 %v223, 16
      %v397 = vrot.slane %v395, 5
      %v398 = vsel %vm264, %v393, %v397
      %v399 = vshrl.u32 %v223, 16
      %v401 = vrot.slane %v399, 4
      %v402 = vor.u32 %v401, %v397
      %v403 = vrot.slane %v402, 4
      %v405 = vshll.u32 %v224, 16
      %v407 = vrot.slane %v405, 5
      %v408 = vsel %vm264, %v403, %v407
      %v410 = vshrl.u32 %v225, 16
      %v412 = vrot.slane %v410, 4
      %v413 = vshll.u32 %v225, 16
      %v415 = vrot.slane %v413, 5
      %v416 = vor.u32 %v412, %v415
      %v417 = vrot.slane %v416, 4
      %v419 = vshll.u32 %v226, 16
      %v421 = vrot.slane %v419, 5
      %v422 = vsel %vm264, %v417, %v421
      %v423 = vshrl.u32 %v226, 16
      %v425 = vrot.slane %v423, 4
      %v426 = vor.u32 %v425, %v421
      %v427 = vrot.slane %v426, 4
      %v429 = vshll.u32 %v227, 16
      %v431 = vrot.slane %v429, 5
      %v432 = vsel %vm264, %v427, %v431
      %v434 = vshrl.u32 %v228, 16
      %v436 = vrot.slane %v434, 4
      %v437 = vshll.u32 %v228, 16
      %v439 = vrot.slane %v437, 5
      %v440 = vor.u32 %v436, %v439
      %v441 = vrot.slane %v440, 4
      %v443 = vshll.u32 %v229, 16
      %v445 = vrot.slane %v443, 5
      %v446 = vsel %vm264, %v441, %v445
      %v447 = vshrl.u32 %v229, 16
      %v449 = vrot.slane %v447, 4
      %v450 = vor.u32 %v449, %v445
      %v451 = vrot.slane %v450, 4
      %v453 = vshll.u32 %v230, 16
      %v455 = vrot.slane %v453, 5
      %v456 = vsel %vm264, %v451, %v455
      %v458 = vshrl.u32 %v231, 16
      %v460 = vrot.slane %v458, 4
      %v461 = vshll.u32 %v231, 16
      %v463 = vrot.slane %v461, 5
      %v464 = vor.u32 %v460, %v463
      %v465 = vrot.slane %v464, 4
      %v467 = vshll.u32 %v232, 16
      %v469 = vrot.slane %v467, 5
      %v470 = vsel %vm264, %v465, %v469
      %v471 = vshrl.u32 %v232, 16
      %v473 = vrot.slane %v471, 4
      %v474 = vor.u32 %v473, %v469
      %v475 = vrot.slane %v474, 4
      %v477 = vshll.u32 %v233, 16
      %v479 = vrot.slane %v477, 5
      %v480 = vsel %vm264, %v475, %v479
      %v482 = vshrl.u32 %v234, 16
      %v484 = vrot.slane %v482, 4
      %v485 = vshll.u32 %v234, 16
      %v487 = vrot.slane %v485, 5
      %v488 = vor.u32 %v484, %v487
      %v489 = vrot.slane %v488, 4
      %v491 = vshll.u32 %v235, 16
      %v493 = vrot.slane %v491, 5
      %v494 = vsel %vm264, %v489, %v493
      %v495 = vshrl.u32 %v235, 16
      %v497 = vrot.slane %v495, 4
      %v498 = vor.u32 %v497, %v493
      %v499 = vrot.slane %v498, 4
      %v501 = vshll.u32 %v236, 16
      %v503 = vrot.slane %v501, 5
      %v504 = vsel %vm264, %v499, %v503
      %v506 = vshrl.u32 %v237, 16
      %v508 = vrot.slane %v506, 4
      %v509 = vshll.u32 %v237, 16
      %v511 = vrot.slane %v509, 5
      %v512 = vor.u32 %v508, %v511
      %v513 = vrot.slane %v512, 4
      %v515 = vshll.u32 %v238, 16
      %v517 = vrot.slane %v515, 5
      %v518 = vsel %vm264, %v513, %v517
      %v519 = vshrl.u32 %v238, 16
      %v521 = vrot.slane %v519, 4
      %v522 = vor.u32 %v521, %v517
      %v523 = vrot.slane %v522, 4
      %v525 = vshll.u32 %v239, 16
      %v527 = vrot.slane %v525, 5
      %v528 = vsel %vm264, %v523, %v527
      %v530 = vshrl.u32 %v240, 16
      %v532 = vrot.slane %v530, 4
      %v533 = vshll.u32 %v240, 16
      %v535 = vrot.slane %v533, 5
      %v536 = vor.u32 %v532, %v535
      %v537 = vrot.slane %v536, 4
      %v539 = vshll.u32 %v241, 16
      %v541 = vrot.slane %v539, 5
      %v542 = vsel %vm264, %v537, %v541
      %v543 = vshrl.u32 %v241, 16
      %v545 = vrot.slane %v543, 4
      %v546 = vor.u32 %v545, %v541
      %v547 = vrot.slane %v546, 4
      %v549 = vshll.u32 %v242, 16
      %v551 = vrot.slane %v549, 5
      %v552 = vsel %vm264, %v547, %v551
      %v554 = vshrl.u32 %v243, 16
      %v556 = vrot.slane %v554, 4
      %v557 = vshll.u32 %v243, 16
      %v559 = vrot.slane %v557, 5
      %v560 = vor.u32 %v556, %v559
      %v561 = vrot.slane %v560, 4
      %v563 = vshll.u32 %v244, 16
      %v565 = vrot.slane %v563, 5
      %v566 = vsel %vm264, %v561, %v565
      %v567 = vshrl.u32 %v244, 16
      %v569 = vrot.slane %v567, 4
      %v570 = vor.u32 %v569, %v565
      %v571 = vrot.slane %v570, 4
      %v573 = vshll.u32 %v245, 16
      %v575 = vrot.slane %v573, 5
      %v576 = vsel %vm264, %v571, %v575
      %v578 = vshrl.u32 %v246, 16
      %v580 = vrot.slane %v578, 4
      %v581 = vshll.u32 %v246, 16
      %v583 = vrot.slane %v581, 5
      %v584 = vor.u32 %v580, %v583
      %v585 = vrot.slane %v584, 4
      %v587 = vshll.u32 %v247, 16
      %v589 = vrot.slane %v587, 5
      %v590 = vsel %vm264, %v585, %v589
      %v591 = vshrl.u32 %v247, 16
      %v593 = vrot.slane %v591, 4
      %v594 = vor.u32 %v593, %v589
      %v595 = vrot.slane %v594, 4
      %v597 = vshll.u32 %v248, 16
      %v599 = vrot.slane %v597, 5
      %v600 = vsel %vm264, %v595, %v599
      %v602 = vshrl.u32 %v249, 16
      %v604 = vrot.slane %v602, 4
      %v605 = vshll.u32 %v249, 16
      %v607 = vrot.slane %v605, 5
      %v608 = vor.u32 %v604, %v607
      %v609 = vrot.slane %v608, 4
      %v611 = vshll.u32 %v250, 16
      %v613 = vrot.slane %v611, 5
      %v614 = vsel %vm264, %v609, %v613
      %v615 = vshrl.u32 %v250, 16
      %v617 = vrot.slane %v615, 4
      %v618 = vor.u32 %v617, %v613
      %v619 = vrot.slane %v618, 4
      %v621 = vshll.u32 %v251, 16
      %v623 = vrot.slane %v621, 5
      %v624 = vsel %vm264, %v619, %v623
      %v626 = vshrl.u32 %v252, 16
      %v628 = vrot.slane %v626, 4
      %v629 = vshll.u32 %v252, 16
      %v631 = vrot.slane %v629, 5
      %v632 = vor.u32 %v628, %v631
      %v633 = vrot.slane %v632, 4
      %v635 = vshll.u32 %v253, 16
      %v637 = vrot.slane %v635, 5
      %v638 = vsel %vm264, %v633, %v637
      %v639 = vshrl.u32 %v253, 16
      %v641 = vrot.slane %v639, 4
      %v642 = vor.u32 %v641, %v637
      %v643 = vrot.slane %v642, 4
      %v645 = vshll.u32 %v254, 16
      %v647 = vrot.slane %v645, 5
      %v648 = vsel %vm264, %v643, %v647
      %s649 = scalar_lea.vmem %s1, 4
      %v650 = vld [vmem:[%s649] sm:$0xf]
      %v651 = vunpack.c.l.b16 %v278
      %v652 = vunpack.c.l.b16 %v288
      %v653 = vunpack.c.l.b16 %v302
      %v654 = vunpack.c.l.b16 %v312
      %v655 = vunpack.c.l.b16 %v326
      %v656 = vunpack.c.l.b16 %v336
      %v657 = vunpack.c.l.b16 %v350
      %v658 = vunpack.c.l.b16 %v360
      %v659 = vunpack.c.l.b16 %v374
      %v660 = vunpack.c.l.b16 %v384
      %v661 = vunpack.c.l.b16 %v398
      %v662 = vunpack.c.l.b16 %v408
      %v663 = vunpack.c.l.b16 %v422
      %v664 = vunpack.c.l.b16 %v432
      %v665 = vunpack.c.l.b16 %v446
      %v666 = vunpack.c.l.b16 %v456
      %v667 = vunpack.c.l.b16 %v470
      %v668 = vunpack.c.l.b16 %v480
      %v669 = vunpack.c.l.b16 %v494
      %v670 = vunpack.c.l.b16 %v504
      %v671 = vunpack.c.l.b16 %v518
      %v672 = vunpack.c.l.b16 %v528
      %v673 = vunpack.c.l.b16 %v542
      %v674 = vunpack.c.l.b16 %v552
      %v675 = vunpack.c.l.b16 %v566
      %v676 = vunpack.c.l.b16 %v576
      %v677 = vunpack.c.l.b16 %v590
      %v678 = vunpack.c.l.b16 %v600
      %v679 = vunpack.c.l.b16 %v614
      %v680 = vunpack.c.l.b16 %v624
      %v681 = vunpack.c.l.b16 %v638
      %v682 = vunpack.c.l.b16 %v648
      %v683 = vpack.c.b16 %v652, %v651
      %v684 = vpack.c.b16 %v654, %v653
      %v685 = vpack.c.b16 %v656, %v655
      %v686 = vpack.c.b16 %v658, %v657
      %v687 = vpack.c.b16 %v660, %v659
      %v688 = vpack.c.b16 %v662, %v661
      %v689 = vpack.c.b16 %v664, %v663
      %v690 = vpack.c.b16 %v666, %v665
      %v691 = vpack.c.b16 %v668, %v667
      %v692 = vpack.c.b16 %v670, %v669
      %v693 = vpack.c.b16 %v672, %v671
      %v694 = vpack.c.b16 %v674, %v673
      %v695 = vpack.c.b16 %v676, %v675
      %v696 = vpack.c.b16 %v678, %v677
      %v697 = vpack.c.b16 %v680, %v679
      %v698 = vpack.c.b16 %v682, %v681
      %vm699 = vcmask 64512
      %v701 = vsel %vm699, %v683, 0
      %v704 = vsel %vm699, %v684, 0
      %v707 = vsel %vm699, %v685, 0
      %v710 = vsel %vm699, %v686, 0
      %v713 = vsel %vm699, %v687, 0
      %v716 = vsel %vm699, %v688, 0
      %v719 = vsel %vm699, %v689, 0
      %v722 = vsel %vm699, %v690, 0
      %v725 = vsel %vm699, %v691, 0
      %v728 = vsel %vm699, %v692, 0
      %v731 = vsel %vm699, %v693, 0
      %v734 = vsel %vm699, %v694, 0
      %v737 = vsel %vm699, %v695, 0
      %v740 = vsel %vm699, %v696, 0
      %v743 = vsel %vm699, %v697, 0
      %v746 = vsel %vm699, %v698, 0
      %vm748 = vcmask 1043456
      %v750 = vsel %vm748, %v650, 0
      %752 = vmatprep.subr.bf16.mxu0 0
      %753 = vmatpush1.bf16.msra.mxu0 0
      %754 = vmatprep.subr.bf16.mxu0 0
      %755 = vmatpush1.bf16.msra.mxu0 0
      %756 = vmatprep.subr.bf16.mxu0 0
      %757 = vmatpush1.bf16.msra.mxu0 0
      %758 = vmatprep.subr.bf16.mxu0 0
      %759 = vmatpush1.bf16.msra.mxu0 0
      %760 = vmatprep.subr.bf16.mxu0 0
      %761 = vmatpush1.bf16.msra.mxu0 0
      %762 = vmatprep.subr.bf16.mxu0 0
      %763 = vmatpush1.bf16.msra.mxu0 0
      %764 = vmatprep.subr.bf16.mxu0 0
      %765 = vmatpush1.bf16.msra.mxu0 0
      %766 = vmatprep.subr.bf16.mxu0 0
      %767 = vmatpush1.bf16.msra.mxu0 %v750
      %768 = vmatprep.subr.bf16.mxu0 0
      %769 = vmatpush2.bf16.msra.mxu0 0
      %770 = vmatprep.subr.bf16.mxu0 0
      %771 = vmatpush2.bf16.msra.mxu0 0
      %772 = vmatprep.subr.bf16.mxu0 0
      %773 = vmatpush2.bf16.msra.mxu0 0
      %774 = vmatprep.subr.bf16.mxu0 0
      %775 = vmatpush2.bf16.msra.mxu0 0
      %776 = vmatprep.subr.bf16.mxu0 0
      %777 = vmatpush2.bf16.msra.mxu0 0
      %778 = vmatprep.subr.bf16.mxu0 0
      %779 = vmatpush2.bf16.msra.mxu0 0
      %780 = vmatprep.subr.bf16.mxu0 0
      %781 = vmatpush2.bf16.msra.mxu0 0
      %782 = vmatprep.subr.bf16.mxu0 0
      %783 = vmatpush2.bf16.msra.mxu0 0
      %784 = vmatprep.mubr.bf16.mxu0 0
      %785 = vmatmul.mubr.bf16.gmra.mxu0 %v701
      %v786 = vpop.f32.mrf.mxu0
      %v787 = vadd.f32 0.0, %v786
      %v788 = vpop.f32.mrf.mxu0
      %v789 = vpop.f32.mrf.mxu0
      %v790 = vadd.f32 0.0, %v789
      %v791 = vpop.f32.mrf.mxu0
      %792 = vmatprep.mubr.bf16.mxu0 0
      %793 = vmatmul.mubr.bf16.gmra.mxu0 %v704
      %v794 = vpop.f32.mrf.mxu0
      %v795 = vadd.f32 0.0, %v794
      %v796 = vpop.f32.mrf.mxu0
      %v797 = vpop.f32.mrf.mxu0
      %v798 = vadd.f32 0.0, %v797
      %v799 = vpop.f32.mrf.mxu0
      %800 = vmatprep.mubr.bf16.mxu0 0
      %801 = vmatmul.mubr.bf16.gmra.mxu0 %v707
      %v802 = vpop.f32.mrf.mxu0
      %v803 = vadd.f32 0.0, %v802
      %v804 = vpop.f32.mrf.mxu0
      %v805 = vpop.f32.mrf.mxu0
      %v806 = vadd.f32 0.0, %v805
      %v807 = vpop.f32.mrf.mxu0
      %808 = vmatprep.mubr.bf16.mxu0 0
      %809 = vmatmul.mubr.bf16.gmra.mxu0 %v710
      %v810 = vpop.f32.mrf.mxu0
      %v811 = vadd.f32 0.0, %v810
      %v812 = vpop.f32.mrf.mxu0
      %v813 = vpop.f32.mrf.mxu0
      %v814 = vadd.f32 0.0, %v813
      %v815 = vpop.f32.mrf.mxu0
      %816 = vmatprep.mubr.bf16.mxu0 0
      %817 = vmatmul.mubr.bf16.gmra.mxu0 %v713
      %v818 = vpop.f32.mrf.mxu0
      %v819 = vadd.f32 0.0, %v818
      %v820 = vpop.f32.mrf.mxu0
      %v821 = vpop.f32.mrf.mxu0
      %v822 = vadd.f32 0.0, %v821
      %v823 = vpop.f32.mrf.mxu0
      %824 = vmatprep.mubr.bf16.mxu0 0
      %825 = vmatmul.mubr.bf16.gmra.mxu0 %v716
      %v826 = vpop.f32.mrf.mxu0
      %v827 = vadd.f32 0.0, %v826
      %v828 = vpop.f32.mrf.mxu0
      %v829 = vpop.f32.mrf.mxu0
      %v830 = vadd.f32 0.0, %v829
      %v831 = vpop.f32.mrf.mxu0
      %832 = vmatprep.mubr.bf16.mxu0 0
      %833 = vmatmul.mubr.bf16.gmra.mxu0 %v719
      %v834 = vpop.f32.mrf.mxu0
      %v835 = vadd.f32 0.0, %v834
      %v836 = vpop.f32.mrf.mxu0
      %v837 = vpop.f32.mrf.mxu0
      %v838 = vadd.f32 0.0, %v837
      %v839 = vpop.f32.mrf.mxu0
      %840 = vmatprep.mubr.bf16.mxu0 0
      %841 = vmatmul.mubr.bf16.gmra.mxu0 %v722
      %v842 = vpop.f32.mrf.mxu0
      %v843 = vadd.f32 0.0, %v842
      %v844 = vpop.f32.mrf.mxu0
      %v845 = vpop.f32.mrf.mxu0
      %v846 = vadd.f32 0.0, %v845
      %v847 = vpop.f32.mrf.mxu0
      %848 = vmatprep.mubr.bf16.mxu0 0
      %849 = vmatmul.mubr.bf16.gmra.mxu0 %v725
      %v850 = vpop.f32.mrf.mxu0
      %v851 = vadd.f32 0.0, %v850
      %v852 = vpop.f32.mrf.mxu0
      %v853 = vpop.f32.mrf.mxu0
      %v854 = vadd.f32 0.0, %v853
      %v855 = vpop.f32.mrf.mxu0
      %856 = vmatprep.mubr.bf16.mxu0 0
      %857 = vmatmul.mubr.bf16.gmra.mxu0 %v728
      %v858 = vpop.f32.mrf.mxu0
      %v859 = vadd.f32 0.0, %v858
      %v860 = vpop.f32.mrf.mxu0
      %v861 = vpop.f32.mrf.mxu0
      %v862 = vadd.f32 0.0, %v861
      %v863 = vpop.f32.mrf.mxu0
      %864 = vmatprep.mubr.bf16.mxu0 0
      %865 = vmatmul.mubr.bf16.gmra.mxu0 %v731
      %v866 = vpop.f32.mrf.mxu0
      %v867 = vadd.f32 0.0, %v866
      %v868 = vpop.f32.mrf.mxu0
      %v869 = vpop.f32.mrf.mxu0
      %v870 = vadd.f32 0.0, %v869
      %v871 = vpop.f32.mrf.mxu0
      %872 = vmatprep.mubr.bf16.mxu0 0
      %873 = vmatmul.mubr.bf16.gmra.mxu0 %v734
      %v874 = vpop.f32.mrf.mxu0
      %v875 = vadd.f32 0.0, %v874
      %v876 = vpop.f32.mrf.mxu0
      %v877 = vpop.f32.mrf.mxu0
      %v878 = vadd.f32 0.0, %v877
      %v879 = vpop.f32.mrf.mxu0
      %880 = vmatprep.mubr.bf16.mxu0 0
      %881 = vmatmul.mubr.bf16.gmra.mxu0 %v737
      %v882 = vpop.f32.mrf.mxu0
      %v883 = vadd.f32 0.0, %v882
      %v884 = vpop.f32.mrf.mxu0
      %v885 = vpop.f32.mrf.mxu0
      %v886 = vadd.f32 0.0, %v885
      %v887 = vpop.f32.mrf.mxu0
      %888 = vmatprep.mubr.bf16.mxu0 0
      %889 = vmatmul.mubr.bf16.gmra.mxu0 %v740
      %v890 = vpop.f32.mrf.mxu0
      %v891 = vadd.f32 0.0, %v890
      %v892 = vpop.f32.mrf.mxu0
      %v893 = vpop.f32.mrf.mxu0
      %v894 = vadd.f32 0.0, %v893
      %v895 = vpop.f32.mrf.mxu0
      %896 = vmatprep.mubr.bf16.mxu0 0
      %897 = vmatmul.mubr.bf16.gmra.mxu0 %v743
      %v898 = vpop.f32.mrf.mxu0
      %v899 = vadd.f32 0.0, %v898
      %v900 = vpop.f32.mrf.mxu0
      %v901 = vpop.f32.mrf.mxu0
      %v902 = vadd.f32 0.0, %v901
      %v903 = vpop.f32.mrf.mxu0
      %904 = vmatprep.mubr.bf16.mxu0 0
      %905 = vmatmul.mubr.bf16.gmra.mxu0 %v746
      %v906 = vpop.f32.mrf.mxu0
      %v907 = vadd.f32 0.0, %v906
      %v908 = vpop.f32.mrf.mxu0
      %v909 = vpop.f32.mrf.mxu0
      %v910 = vadd.f32 0.0, %v909
      %v911 = vpop.f32.mrf.mxu0
      %912 = vdwg.mxu0
      %v945 = vunpack.c.l.b16 %v207
      %v946 = vunpack.c.l.b16 %v208
      %v947 = vunpack.c.l.b16 %v210
      %v948 = vunpack.c.l.b16 %v211
      %v949 = vunpack.c.l.b16 %v213
      %v950 = vunpack.c.l.b16 %v214
      %v951 = vunpack.c.l.b16 %v216
      %v952 = vunpack.c.l.b16 %v217
      %v953 = vunpack.c.l.b16 %v219
      %v954 = vunpack.c.l.b16 %v220
      %v955 = vunpack.c.l.b16 %v222
      %v956 = vunpack.c.l.b16 %v223
      %v957 = vunpack.c.l.b16 %v225
      %v958 = vunpack.c.l.b16 %v226
      %v959 = vunpack.c.l.b16 %v228
      %v960 = vunpack.c.l.b16 %v229
      %v961 = vunpack.c.l.b16 %v231
      %v962 = vunpack.c.l.b16 %v232
      %v963 = vunpack.c.l.b16 %v234
      %v964 = vunpack.c.l.b16 %v235
      %v965 = vunpack.c.l.b16 %v237
      %v966 = vunpack.c.l.b16 %v238
      %v967 = vunpack.c.l.b16 %v240
      %v968 = vunpack.c.l.b16 %v241
      %v969 = vunpack.c.l.b16 %v243
      %v970 = vunpack.c.l.b16 %v244
      %v971 = vunpack.c.l.b16 %v246
      %v972 = vunpack.c.l.b16 %v247
      %v973 = vunpack.c.l.b16 %v249
      %v974 = vunpack.c.l.b16 %v250
      %v975 = vunpack.c.l.b16 %v252
      %v976 = vunpack.c.l.b16 %v253
      %v977 = vpack.c.b16 %v946, %v945
      %v978 = vpack.c.b16 %v948, %v947
      %v979 = vpack.c.b16 %v950, %v949
      %v980 = vpack.c.b16 %v952, %v951
      %v981 = vpack.c.b16 %v954, %v953
      %v982 = vpack.c.b16 %v956, %v955
      %v983 = vpack.c.b16 %v958, %v957
      %v984 = vpack.c.b16 %v960, %v959
      %v985 = vpack.c.b16 %v962, %v961
      %v986 = vpack.c.b16 %v964, %v963
      %v987 = vpack.c.b16 %v966, %v965
      %v988 = vpack.c.b16 %v968, %v967
      %v989 = vpack.c.b16 %v970, %v969
      %v990 = vpack.c.b16 %v972, %v971
      %v991 = vpack.c.b16 %v974, %v973
      %v992 = vpack.c.b16 %v976, %v975
      %v994 = vsel %vm699, %v977, 0
      %v997 = vsel %vm699, %v978, 0
      %v1000 = vsel %vm699, %v979, 0
      %v1003 = vsel %vm699, %v980, 0
      %v1006 = vsel %vm699, %v981, 0
      %v1009 = vsel %vm699, %v982, 0
      %v1012 = vsel %vm699, %v983, 0
      %v1015 = vsel %vm699, %v984, 0
      %v1018 = vsel %vm699, %v985, 0
      %v1021 = vsel %vm699, %v986, 0
      %v1024 = vsel %vm699, %v987, 0
      %v1027 = vsel %vm699, %v988, 0
      %v1030 = vsel %vm699, %v989, 0
      %v1033 = vsel %vm699, %v990, 0
      %v1036 = vsel %vm699, %v991, 0
      %v1039 = vsel %vm699, %v992, 0
      %v1042 = vsel %vm748, %v261, 0
      %1044 = vmatprep.subr.bf16.mxu0 0
      %1045 = vmatpush1.bf16.msra.mxu0 0
      %1046 = vmatprep.subr.bf16.mxu0 0
      %1047 = vmatpush1.bf16.msra.mxu0 0
      %1048 = vmatprep.subr.bf16.mxu0 0
      %1049 = vmatpush1.bf16.msra.mxu0 0
      %1050 = vmatprep.subr.bf16.mxu0 0
      %1051 = vmatpush1.bf16.msra.mxu0 0
      %1052 = vmatprep.subr.bf16.mxu0 0
      %1053 = vmatpush1.bf16.msra.mxu0 0
      %1054 = vmatprep.subr.bf16.mxu0 0
      %1055 = vmatpush1.bf16.msra.mxu0 0
      %1056 = vmatprep.subr.bf16.mxu0 0
      %1057 = vmatpush1.bf16.msra.mxu0 0
      %1058 = vmatprep.subr.bf16.mxu0 0
      %1059 = vmatpush1.bf16.msra.mxu0 %v1042
      %1060 = vmatprep.subr.bf16.mxu0 0
      %1061 = vmatpush2.bf16.msra.mxu0 0
      %1062 = vmatprep.subr.bf16.mxu0 0
      %1063 = vmatpush2.bf16.msra.mxu0 0
      %1064 = vmatprep.subr.bf16.mxu0 0
      %1065 = vmatpush2.bf16.msra.mxu0 0
      %1066 = vmatprep.subr.bf16.mxu0 0
      %1067 = vmatpush2.bf16.msra.mxu0 0
      %1068 = vmatprep.subr.bf16.mxu0 0
      %1069 = vmatpush2.bf16.msra.mxu0 0
      %1070 = vmatprep.subr.bf16.mxu0 0
      %1071 = vmatpush2.bf16.msra.mxu0 0
      %1072 = vmatprep.subr.bf16.mxu0 0
      %1073 = vmatpush2.bf16.msra.mxu0 0
      %1074 = vmatprep.subr.bf16.mxu0 0
      %1075 = vmatpush2.bf16.msra.mxu0 0
      %1076 = vmatprep.mubr.bf16.mxu0 0
      %1077 = vmatmul.mubr.bf16.gmra.mxu0 %v994
      %v1078 = vpop.f32.mrf.mxu0
      %v1079 = vadd.f32 %v787, %v1078
      %v1080 = vpop.f32.mrf.mxu0
      %v1081 = vpop.f32.mrf.mxu0
      %v1082 = vadd.f32 %v790, %v1081
      %v1083 = vpop.f32.mrf.mxu0
      %1084 = vmatprep.mubr.bf16.mxu0 0
      %1085 = vmatmul.mubr.bf16.gmra.mxu0 %v997
      %v1086 = vpop.f32.mrf.mxu0
      %v1087 = vadd.f32 %v795, %v1086
      %v1088 = vpop.f32.mrf.mxu0
      %v1089 = vpop.f32.mrf.mxu0
      %v1090 = vadd.f32 %v798, %v1089
      %v1091 = vpop.f32.mrf.mxu0
      %1092 = vmatprep.mubr.bf16.mxu0 0
      %1093 = vmatmul.mubr.bf16.gmra.mxu0 %v1000
      %v1094 = vpop.f32.mrf.mxu0
      %v1095 = vadd.f32 %v803, %v1094
      %v1096 = vpop.f32.mrf.mxu0
      %v1097 = vpop.f32.mrf.mxu0
      %v1098 = vadd.f32 %v806, %v1097
      %v1099 = vpop.f32.mrf.mxu0
      %1100 = vmatprep.mubr.bf16.mxu0 0
      %1101 = vmatmul.mubr.bf16.gmra.mxu0 %v1003
      %v1102 = vpop.f32.mrf.mxu0
      %v1103 = vadd.f32 %v811, %v1102
      %v1104 = vpop.f32.mrf.mxu0
      %v1105 = vpop.f32.mrf.mxu0
      %v1106 = vadd.f32 %v814, %v1105
      %v1107 = vpop.f32.mrf.mxu0
      %1108 = vmatprep.mubr.bf16.mxu0 0
      %1109 = vmatmul.mubr.bf16.gmra.mxu0 %v1006
      %v1110 = vpop.f32.mrf.mxu0
      %v1111 = vadd.f32 %v819, %v1110
      %v1112 = vpop.f32.mrf.mxu0
      %v1113 = vpop.f32.mrf.mxu0
      %v1114 = vadd.f32 %v822, %v1113
      %v1115 = vpop.f32.mrf.mxu0
      %1116 = vmatprep.mubr.bf16.mxu0 0
      %1117 = vmatmul.mubr.bf16.gmra.mxu0 %v1009
      %v1118 = vpop.f32.mrf.mxu0
      %v1119 = vadd.f32 %v827, %v1118
      %v1120 = vpop.f32.mrf.mxu0
      %v1121 = vpop.f32.mrf.mxu0
      %v1122 = vadd.f32 %v830, %v1121
      %v1123 = vpop.f32.mrf.mxu0
      %1124 = vmatprep.mubr.bf16.mxu0 0
      %1125 = vmatmul.mubr.bf16.gmra.mxu0 %v1012
      %v1126 = vpop.f32.mrf.mxu0
      %v1127 = vadd.f32 %v835, %v1126
      %v1128 = vpop.f32.mrf.mxu0
      %v1129 = vpop.f32.mrf.mxu0
      %v1130 = vadd.f32 %v838, %v1129
      %v1131 = vpop.f32.mrf.mxu0
      %1132 = vmatprep.mubr.bf16.mxu0 0
      %1133 = vmatmul.mubr.bf16.gmra.mxu0 %v1015
      %v1134 = vpop.f32.mrf.mxu0
      %v1135 = vadd.f32 %v843, %v1134
      %v1136 = vpop.f32.mrf.mxu0
      %v1137 = vpop.f32.mrf.mxu0
      %v1138 = vadd.f32 %v846, %v1137
      %v1139 = vpop.f32.mrf.mxu0
      %1140 = vmatprep.mubr.bf16.mxu0 0
      %1141 = vmatmul.mubr.bf16.gmra.mxu0 %v1018
      %v1142 = vpop.f32.mrf.mxu0
      %v1143 = vadd.f32 %v851, %v1142
      %v1144 = vpop.f32.mrf.mxu0
      %v1145 = vpop.f32.mrf.mxu0
      %v1146 = vadd.f32 %v854, %v1145
      %v1147 = vpop.f32.mrf.mxu0
      %1148 = vmatprep.mubr.bf16.mxu0 0
      %1149 = vmatmul.mubr.bf16.gmra.mxu0 %v1021
      %v1150 = vpop.f32.mrf.mxu0
      %v1151 = vadd.f32 %v859, %v1150
      %v1152 = vpop.f32.mrf.mxu0
      %v1153 = vpop.f32.mrf.mxu0
      %v1154 = vadd.f32 %v862, %v1153
      %v1155 = vpop.f32.mrf.mxu0
      %1156 = vmatprep.mubr.bf16.mxu0 0
      %1157 = vmatmul.mubr.bf16.gmra.mxu0 %v1024
      %v1158 = vpop.f32.mrf.mxu0
      %v1159 = vadd.f32 %v867, %v1158
      %v1160 = vpop.f32.mrf.mxu0
      %v1161 = vpop.f32.mrf.mxu0
      %v1162 = vadd.f32 %v870, %v1161
      %v1163 = vpop.f32.mrf.mxu0
      %1164 = vmatprep.mubr.bf16.mxu0 0
      %1165 = vmatmul.mubr.bf16.gmra.mxu0 %v1027
      %v1166 = vpop.f32.mrf.mxu0
      %v1167 = vadd.f32 %v875, %v1166
      %v1168 = vpop.f32.mrf.mxu0
      %v1169 = vpop.f32.mrf.mxu0
      %v1170 = vadd.f32 %v878, %v1169
      %v1171 = vpop.f32.mrf.mxu0
      %1172 = vmatprep.mubr.bf16.mxu0 0
      %1173 = vmatmul.mubr.bf16.gmra.mxu0 %v1030
      %v1174 = vpop.f32.mrf.mxu0
      %v1175 = vadd.f32 %v883, %v1174
      %v1176 = vpop.f32.mrf.mxu0
      %v1177 = vpop.f32.mrf.mxu0
      %v1178 = vadd.f32 %v886, %v1177
      %v1179 = vpop.f32.mrf.mxu0
      %1180 = vmatprep.mubr.bf16.mxu0 0
      %1181 = vmatmul.mubr.bf16.gmra.mxu0 %v1033
      %v1182 = vpop.f32.mrf.mxu0
      %v1183 = vadd.f32 %v891, %v1182
      %v1184 = vpop.f32.mrf.mxu0
      %v1185 = vpop.f32.mrf.mxu0
      %v1186 = vadd.f32 %v894, %v1185
      %v1187 = vpop.f32.mrf.mxu0
      %1188 = vmatprep.mubr.bf16.mxu0 0
      %1189 = vmatmul.mubr.bf16.gmra.mxu0 %v1036
      %v1190 = vpop.f32.mrf.mxu0
      %v1191 = vadd.f32 %v899, %v1190
      %v1192 = vpop.f32.mrf.mxu0
      %v1193 = vpop.f32.mrf.mxu0
      %v1194 = vadd.f32 %v902, %v1193
      %v1195 = vpop.f32.mrf.mxu0
      %1196 = vmatprep.mubr.bf16.mxu0 0
      %1197 = vmatmul.mubr.bf16.gmra.mxu0 %v1039
      %v1198 = vpop.f32.mrf.mxu0
      %v1199 = vadd.f32 %v907, %v1198
      %v1200 = vpop.f32.mrf.mxu0
      %v1201 = vpop.f32.mrf.mxu0
      %v1202 = vadd.f32 %v910, %v1201
      %v1203 = vpop.f32.mrf.mxu0
      %1204 = vdwg.mxu0
      %vm1221 = vcmask 1042432
      %vm1222 = vcmask 1046532
      %vm1223 = vmor %vm1221, %vm1222
      %v1224 = vrot.slane %v207, 5
      %v1225 = vrot.slane %v1224, 4
      %v1226 = vrot.slane %v208, 5
      %v1227 = vsel %vm1223, %v1225, %v1226
      %v1228 = vrot.slane %v1226, 4
      %v1229 = vrot.slane %v209, 5
      %v1230 = vsel %vm1223, %v1228, %v1229
      %v1231 = vrot.slane %v210, 5
      %v1232 = vrot.slane %v1231, 4
      %v1233 = vrot.slane %v211, 5
      %v1234 = vsel %vm1223, %v1232, %v1233
      %v1235 = vrot.slane %v1233, 4
      %v1236 = vrot.slane %v212, 5
      %v1237 = vsel %vm1223, %v1235, %v1236
      %v1238 = vrot.slane %v213, 5
      %v1239 = vrot.slane %v1238, 4
      %v1240 = vrot.slane %v214, 5
      %v1241 = vsel %vm1223, %v1239, %v1240
      %v1242 = vrot.slane %v1240, 4
      %v1243 = vrot.slane %v215, 5
      %v1244 = vsel %vm1223, %v1242, %v1243
      %v1245 = vrot.slane %v216, 5
      %v1246 = vrot.slane %v1245, 4
      %v1247 = vrot.slane %v217, 5
      %v1248 = vsel %vm1223, %v1246, %v1247
      %v1249 = vrot.slane %v1247, 4
      %v1250 = vrot.slane %v218, 5
      %v1251 = vsel %vm1223, %v1249, %v1250
      %v1252 = vrot.slane %v219, 5
      %v1253 = vrot.slane %v1252, 4
      %v1254 = vrot.slane %v220, 5
      %v1255 = vsel %vm1223, %v1253, %v1254
      %v1256 = vrot.slane %v1254, 4
      %v1257 = vrot.slane %v221, 5
      %v1258 = vsel %vm1223, %v1256, %v1257
      %v1259 = vrot.slane %v222, 5
      %v1260 = vrot.slane %v1259, 4
      %v1261 = vrot.slane %v223, 5
      %v1262 = vsel %vm1223, %v1260, %v1261
      %v1263 = vrot.slane %v1261, 4
      %v1264 = vrot.slane %v224, 5
      %v1265 = vsel %vm1223, %v1263, %v1264
      %v1266 = vrot.slane %v225, 5
      %v1267 = vrot.slane %v1266, 4
      %v1268 = vrot.slane %v226, 5
      %v1269 = vsel %vm1223, %v1267, %v1268
      %v1270 = vrot.slane %v1268, 4
      %v1271 = vrot.slane %v227, 5
      %v1272 = vsel %vm1223, %v1270, %v1271
      %v1273 = vrot.slane %v228, 5
      %v1274 = vrot.slane %v1273, 4
      %v1275 = vrot.slane %v229, 5
      %v1276 = vsel %vm1223, %v1274, %v1275
      %v1277 = vrot.slane %v1275, 4
      %v1278 = vrot.slane %v230, 5
      %v1279 = vsel %vm1223, %v1277, %v1278
      %v1280 = vrot.slane %v231, 5
      %v1281 = vrot.slane %v1280, 4
      %v1282 = vrot.slane %v232, 5
      %v1283 = vsel %vm1223, %v1281, %v1282
      %v1284 = vrot.slane %v1282, 4
      %v1285 = vrot.slane %v233, 5
      %v1286 = vsel %vm1223, %v1284, %v1285
      %v1287 = vrot.slane %v234, 5
      %v1288 = vrot.slane %v1287, 4
      %v1289 = vrot.slane %v235, 5
      %v1290 = vsel %vm1223, %v1288, %v1289
      %v1291 = vrot.slane %v1289, 4
      %v1292 = vrot.slane %v236, 5
      %v1293 = vsel %vm1223, %v1291, %v1292
      %v1294 = vrot.slane %v237, 5
      %v1295 = vrot.slane %v1294, 4
      %v1296 = vrot.slane %v238, 5
      %v1297 = vsel %vm1223, %v1295, %v1296
      %v1298 = vrot.slane %v1296, 4
      %v1299 = vrot.slane %v239, 5
      %v1300 = vsel %vm1223, %v1298, %v1299
      %v1301 = vrot.slane %v240, 5
      %v1302 = vrot.slane %v1301, 4
      %v1303 = vrot.slane %v241, 5
      %v1304 = vsel %vm1223, %v1302, %v1303
      %v1305 = vrot.slane %v1303, 4
      %v1306 = vrot.slane %v242, 5
      %v1307 = vsel %vm1223, %v1305, %v1306
      %v1308 = vrot.slane %v243, 5
      %v1309 = vrot.slane %v1308, 4
      %v1310 = vrot.slane %v244, 5
      %v1311 = vsel %vm1223, %v1309, %v1310
      %v1312 = vrot.slane %v1310, 4
      %v1313 = vrot.slane %v245, 5
      %v1314 = vsel %vm1223, %v1312, %v1313
      %v1315 = vrot.slane %v246, 5
      %v1316 = vrot.slane %v1315, 4
      %v1317 = vrot.slane %v247, 5
      %v1318 = vsel %vm1223, %v1316, %v1317
      %v1319 = vrot.slane %v1317, 4
      %v1320 = vrot.slane %v248, 5
      %v1321 = vsel %vm1223, %v1319, %v1320
      %v1322 = vrot.slane %v249, 5
      %v1323 = vrot.slane %v1322, 4
      %v1324 = vrot.slane %v250, 5
      %v1325 = vsel %vm1223, %v1323, %v1324
      %v1326 = vrot.slane %v1324, 4
      %v1327 = vrot.slane %v251, 5
      %v1328 = vsel %vm1223, %v1326, %v1327
      %v1329 = vrot.slane %v252, 5
      %v1330 = vrot.slane %v1329, 4
      %v1331 = vrot.slane %v253, 5
      %v1332 = vsel %vm1223, %v1330, %v1331
      %v1333 = vrot.slane %v1331, 4
      %v1334 = vrot.slane %v254, 5
      %v1335 = vsel %vm1223, %v1333, %v1334
      %s1336 = scalar_lea.vmem %s1, 8
      %v1337 = vld [vmem:[%s1336] sm:$0xf]
      %v1338 = vunpack.c.l.b16 %v1227
      %v1339 = vunpack.c.l.b16 %v1230
      %v1340 = vunpack.c.l.b16 %v1234
      %v1341 = vunpack.c.l.b16 %v1237
      %v1342 = vunpack.c.l.b16 %v1241
      %v1343 = vunpack.c.l.b16 %v1244
      %v1344 = vunpack.c.l.b16 %v1248
      %v1345 = vunpack.c.l.b16 %v1251
      %v1346 = vunpack.c.l.b16 %v1255
      %v1347 = vunpack.c.l.b16 %v1258
      %v1348 = vunpack.c.l.b16 %v1262
      %v1349 = vunpack.c.l.b16 %v1265
      %v1350 = vunpack.c.l.b16 %v1269
      %v1351 = vunpack.c.l.b16 %v1272
      %v1352 = vunpack.c.l.b16 %v1276
      %v1353 = vunpack.c.l.b16 %v1279
      %v1354 = vunpack.c.l.b16 %v1283
      %v1355 = vunpack.c.l.b16 %v1286
      %v1356 = vunpack.c.l.b16 %v1290
      %v1357 = vunpack.c.l.b16 %v1293
      %v1358 = vunpack.c.l.b16 %v1297
      %v1359 = vunpack.c.l.b16 %v1300
      %v1360 = vunpack.c.l.b16 %v1304
      %v1361 = vunpack.c.l.b16 %v1307
      %v1362 = vunpack.c.l.b16 %v1311
      %v1363 = vunpack.c.l.b16 %v1314
      %v1364 = vunpack.c.l.b16 %v1318
      %v1365 = vunpack.c.l.b16 %v1321
      %v1366 = vunpack.c.l.b16 %v1325
      %v1367 = vunpack.c.l.b16 %v1328
      %v1368 = vunpack.c.l.b16 %v1332
      %v1369 = vunpack.c.l.b16 %v1335
      %v1370 = vpack.c.b16 %v1339, %v1338
      %v1371 = vpack.c.b16 %v1341, %v1340
      %v1372 = vpack.c.b16 %v1343, %v1342
      %v1373 = vpack.c.b16 %v1345, %v1344
      %v1374 = vpack.c.b16 %v1347, %v1346
      %v1375 = vpack.c.b16 %v1349, %v1348
      %v1376 = vpack.c.b16 %v1351, %v1350
      %v1377 = vpack.c.b16 %v1353, %v1352
      %v1378 = vpack.c.b16 %v1355, %v1354
      %v1379 = vpack.c.b16 %v1357, %v1356
      %v1380 = vpack.c.b16 %v1359, %v1358
      %v1381 = vpack.c.b16 %v1361, %v1360
      %v1382 = vpack.c.b16 %v1363, %v1362
      %v1383 = vpack.c.b16 %v1365, %v1364
      %v1384 = vpack.c.b16 %v1367, %v1366
      %v1385 = vpack.c.b16 %v1369, %v1368
      %v1387 = vsel %vm699, %v1370, 0
      %v1390 = vsel %vm699, %v1371, 0
      %v1393 = vsel %vm699, %v1372, 0
      %v1396 = vsel %vm699, %v1373, 0
      %v1399 = vsel %vm699, %v1374, 0
      %v1402 = vsel %vm699, %v1375, 0
      %v1405 = vsel %vm699, %v1376, 0
      %v1408 = vsel %vm699, %v1377, 0
      %v1411 = vsel %vm699, %v1378, 0
      %v1414 = vsel %vm699, %v1379, 0
      %v1417 = vsel %vm699, %v1380, 0
      %v1420 = vsel %vm699, %v1381, 0
      %v1423 = vsel %vm699, %v1382, 0
      %v1426 = vsel %vm699, %v1383, 0
      %v1429 = vsel %vm699, %v1384, 0
      %v1432 = vsel %vm699, %v1385, 0
      %v1435 = vsel %vm748, %v1337, 0
      %1437 = vmatprep.subr.bf16.mxu0 0
      %1438 = vmatpush1.bf16.msra.mxu0 0
      %1439 = vmatprep.subr.bf16.mxu0 0
      %1440 = vmatpush1.bf16.msra.mxu0 0
      %1441 = vmatprep.subr.bf16.mxu0 0
      %1442 = vmatpush1.bf16.msra.mxu0 0
      %1443 = vmatprep.subr.bf16.mxu0 0
      %1444 = vmatpush1.bf16.msra.mxu0 0
      %1445 = vmatprep.subr.bf16.mxu0 0
      %1446 = vmatpush1.bf16.msra.mxu0 0
      %1447 = vmatprep.subr.bf16.mxu0 0
      %1448 = vmatpush1.bf16.msra.mxu0 0
      %1449 = vmatprep.subr.bf16.mxu0 0
      %1450 = vmatpush1.bf16.msra.mxu0 0
      %1451 = vmatprep.subr.bf16.mxu0 0
      %1452 = vmatpush1.bf16.msra.mxu0 %v1435
      %1453 = vmatprep.subr.bf16.mxu0 0
      %1454 = vmatpush2.bf16.msra.mxu0 0
      %1455 = vmatprep.subr.bf16.mxu0 0
      %1456 = vmatpush2.bf16.msra.mxu0 0
      %1457 = vmatprep.subr.bf16.mxu0 0
      %1458 = vmatpush2.bf16.msra.mxu0 0
      %1459 = vmatprep.subr.bf16.mxu0 0
      %1460 = vmatpush2.bf16.msra.mxu0 0
      %1461 = vmatprep.subr.bf16.mxu0 0
      %1462 = vmatpush2.bf16.msra.mxu0 0
      %1463 = vmatprep.subr.bf16.mxu0 0
      %1464 = vmatpush2.bf16.msra.mxu0 0
      %1465 = vmatprep.subr.bf16.mxu0 0
      %1466 = vmatpush2.bf16.msra.mxu0 0
      %1467 = vmatprep.subr.bf16.mxu0 0
      %1468 = vmatpush2.bf16.msra.mxu0 0
      %1469 = vmatprep.mubr.bf16.mxu0 0
      %1470 = vmatmul.mubr.bf16.gmra.mxu0 %v1387
      %v1471 = vpop.f32.mrf.mxu0
      %v1472 = vadd.f32 0.0, %v1471
      %v1473 = vpop.f32.mrf.mxu0
      %v1474 = vpop.f32.mrf.mxu0
      %v1475 = vadd.f32 0.0, %v1474
      %v1476 = vpop.f32.mrf.mxu0
      %1477 = vmatprep.mubr.bf16.mxu0 0
      %1478 = vmatmul.mubr.bf16.gmra.mxu0 %v1390
      %v1479 = vpop.f32.mrf.mxu0
      %v1480 = vadd.f32 0.0, %v1479
      %v1481 = vpop.f32.mrf.mxu0
      %v1482 = vpop.f32.mrf.mxu0
      %v1483 = vadd.f32 0.0, %v1482
      %v1484 = vpop.f32.mrf.mxu0
      %1485 = vmatprep.mubr.bf16.mxu0 0
      %1486 = vmatmul.mubr.bf16.gmra.mxu0 %v1393
      %v1487 = vpop.f32.mrf.mxu0
      %v1488 = vadd.f32 0.0, %v1487
      %v1489 = vpop.f32.mrf.mxu0
      %v1490 = vpop.f32.mrf.mxu0
      %v1491 = vadd.f32 0.0, %v1490
      %v1492 = vpop.f32.mrf.mxu0
      %1493 = vmatprep.mubr.bf16.mxu0 0
      %1494 = vmatmul.mubr.bf16.gmra.mxu0 %v1396
      %v1495 = vpop.f32.mrf.mxu0
      %v1496 = vadd.f32 0.0, %v1495
      %v1497 = vpop.f32.mrf.mxu0
      %v1498 = vpop.f32.mrf.mxu0
      %v1499 = vadd.f32 0.0, %v1498
      %v1500 = vpop.f32.mrf.mxu0
      %1501 = vmatprep.mubr.bf16.mxu0 0
      %1502 = vmatmul.mubr.bf16.gmra.mxu0 %v1399
      %v1503 = vpop.f32.mrf.mxu0
      %v1504 = vadd.f32 0.0, %v1503
      %v1505 = vpop.f32.mrf.mxu0
      %v1506 = vpop.f32.mrf.mxu0
      %v1507 = vadd.f32 0.0, %v1506
      %v1508 = vpop.f32.mrf.mxu0
      %1509 = vmatprep.mubr.bf16.mxu0 0
      %1510 = vmatmul.mubr.bf16.gmra.mxu0 %v1402
      %v1511 = vpop.f32.mrf.mxu0
      %v1512 = vadd.f32 0.0, %v1511
      %v1513 = vpop.f32.mrf.mxu0
      %v1514 = vpop.f32.mrf.mxu0
      %v1515 = vadd.f32 0.0, %v1514
      %v1516 = vpop.f32.mrf.mxu0
      %1517 = vmatprep.mubr.bf16.mxu0 0
      %1518 = vmatmul.mubr.bf16.gmra.mxu0 %v1405
      %v1519 = vpop.f32.mrf.mxu0
      %v1520 = vadd.f32 0.0, %v1519
      %v1521 = vpop.f32.mrf.mxu0
      %v1522 = vpop.f32.mrf.mxu0
      %v1523 = vadd.f32 0.0, %v1522
      %v1524 = vpop.f32.mrf.mxu0
      %1525 = vmatprep.mubr.bf16.mxu0 0
      %1526 = vmatmul.mubr.bf16.gmra.mxu0 %v1408
      %v1527 = vpop.f32.mrf.mxu0
      %v1528 = vadd.f32 0.0, %v1527
      %v1529 = vpop.f32.mrf.mxu0
      %v1530 = vpop.f32.mrf.mxu0
      %v1531 = vadd.f32 0.0, %v1530
      %v1532 = vpop.f32.mrf.mxu0
      %1533 = vmatprep.mubr.bf16.mxu0 0
      %1534 = vmatmul.mubr.bf16.gmra.mxu0 %v1411
      %v1535 = vpop.f32.mrf.mxu0
      %v1536 = vadd.f32 0.0, %v1535
      %v1537 = vpop.f32.mrf.mxu0
      %v1538 = vpop.f32.mrf.mxu0
      %v1539 = vadd.f32 0.0, %v1538
      %v1540 = vpop.f32.mrf.mxu0
      %1541 = vmatprep.mubr.bf16.mxu0 0
      %1542 = vmatmul.mubr.bf16.gmra.mxu0 %v1414
      %v1543 = vpop.f32.mrf.mxu0
      %v1544 = vadd.f32 0.0, %v1543
      %v1545 = vpop.f32.mrf.mxu0
      %v1546 = vpop.f32.mrf.mxu0
      %v1547 = vadd.f32 0.0, %v1546
      %v1548 = vpop.f32.mrf.mxu0
      %1549 = vmatprep.mubr.bf16.mxu0 0
      %1550 = vmatmul.mubr.bf16.gmra.mxu0 %v1417
      %v1551 = vpop.f32.mrf.mxu0
      %v1552 = vadd.f32 0.0, %v1551
      %v1553 = vpop.f32.mrf.mxu0
      %v1554 = vpop.f32.mrf.mxu0
      %v1555 = vadd.f32 0.0, %v1554
      %v1556 = vpop.f32.mrf.mxu0
      %1557 = vmatprep.mubr.bf16.mxu0 0
      %1558 = vmatmul.mubr.bf16.gmra.mxu0 %v1420
      %v1559 = vpop.f32.mrf.mxu0
      %v1560 = vadd.f32 0.0, %v1559
      %v1561 = vpop.f32.mrf.mxu0
      %v1562 = vpop.f32.mrf.mxu0
      %v1563 = vadd.f32 0.0, %v1562
      %v1564 = vpop.f32.mrf.mxu0
      %1565 = vmatprep.mubr.bf16.mxu0 0
      %1566 = vmatmul.mubr.bf16.gmra.mxu0 %v1423
      %v1567 = vpop.f32.mrf.mxu0
      %v1568 = vadd.f32 0.0, %v1567
      %v1569 = vpop.f32.mrf.mxu0
      %v1570 = vpop.f32.mrf.mxu0
      %v1571 = vadd.f32 0.0, %v1570
      %v1572 = vpop.f32.mrf.mxu0
      %1573 = vmatprep.mubr.bf16.mxu0 0
      %1574 = vmatmul.mubr.bf16.gmra.mxu0 %v1426
      %v1575 = vpop.f32.mrf.mxu0
      %v1576 = vadd.f32 0.0, %v1575
      %v1577 = vpop.f32.mrf.mxu0
      %v1578 = vpop.f32.mrf.mxu0
      %v1579 = vadd.f32 0.0, %v1578
      %v1580 = vpop.f32.mrf.mxu0
      %1581 = vmatprep.mubr.bf16.mxu0 0
      %1582 = vmatmul.mubr.bf16.gmra.mxu0 %v1429
      %v1583 = vpop.f32.mrf.mxu0
      %v1584 = vadd.f32 0.0, %v1583
      %v1585 = vpop.f32.mrf.mxu0
      %v1586 = vpop.f32.mrf.mxu0
      %v1587 = vadd.f32 0.0, %v1586
      %v1588 = vpop.f32.mrf.mxu0
      %1589 = vmatprep.mubr.bf16.mxu0 0
      %1590 = vmatmul.mubr.bf16.gmra.mxu0 %v1432
      %v1591 = vpop.f32.mrf.mxu0
      %v1592 = vadd.f32 0.0, %v1591
      %v1593 = vpop.f32.mrf.mxu0
      %v1594 = vpop.f32.mrf.mxu0
      %v1595 = vadd.f32 0.0, %v1594
      %v1596 = vpop.f32.mrf.mxu0
      %1597 = vdwg.mxu0
      %v1598 = vadd.f32 %v1079, %v1472
      %v1599 = vadd.f32 %v1082, %v1475
      %v1600 = vadd.f32 %v1087, %v1480
      %v1601 = vadd.f32 %v1090, %v1483
      %v1602 = vadd.f32 %v1095, %v1488
      %v1603 = vadd.f32 %v1098, %v1491
      %v1604 = vadd.f32 %v1103, %v1496
      %v1605 = vadd.f32 %v1106, %v1499
      %v1606 = vadd.f32 %v1111, %v1504
      %v1607 = vadd.f32 %v1114, %v1507
      %v1608 = vadd.f32 %v1119, %v1512
      %v1609 = vadd.f32 %v1122, %v1515
      %v1610 = vadd.f32 %v1127, %v1520
      %v1611 = vadd.f32 %v1130, %v1523
      %v1612 = vadd.f32 %v1135, %v1528
      %v1613 = vadd.f32 %v1138, %v1531
      %v1614 = vadd.f32 %v1143, %v1536
      %v1615 = vadd.f32 %v1146, %v1539
      %v1616 = vadd.f32 %v1151, %v1544
      %v1617 = vadd.f32 %v1154, %v1547
      %v1618 = vadd.f32 %v1159, %v1552
      %v1619 = vadd.f32 %v1162, %v1555
      %v1620 = vadd.f32 %v1167, %v1560
      %v1621 = vadd.f32 %v1170, %v1563
      %v1622 = vadd.f32 %v1175, %v1568
      %v1623 = vadd.f32 %v1178, %v1571
      %v1624 = vadd.f32 %v1183, %v1576
      %v1625 = vadd.f32 %v1186, %v1579
      %v1626 = vadd.f32 %v1191, %v1584
      %v1627 = vadd.f32 %v1194, %v1587
      %v1628 = vadd.f32 %v1199, %v1592
      %v1629 = vadd.f32 %v1202, %v1595
      %s1630 = scalar_lea.vmem %s1, 12
      %v1631 = vld [vmem:[%s1630] sm:$0xf]
      %v1634 = vunpack.c.l.b16 %v255
      %v1635 = vunpack.c.l.b16 %v256
      %v1636 = vpack.c.b16 %v1635, %v1634
      %v1638 = vsel %vm699, %v1636, 0
      %v1641 = vsel %vm748, %v1631, 0
      %1643 = vmatprep.subr.bf16.mxu0 0
      %1644 = vmatpush1.bf16.msra.mxu0 0
      %1645 = vmatprep.subr.bf16.mxu0 0
      %1646 = vmatpush1.bf16.msra.mxu0 0
      %1647 = vmatprep.subr.bf16.mxu0 0
      %1648 = vmatpush1.bf16.msra.mxu0 0
      %1649 = vmatprep.subr.bf16.mxu0 0
      %1650 = vmatpush1.bf16.msra.mxu0 0
      %1651 = vmatprep.subr.bf16.mxu0 0
      %1652 = vmatpush1.bf16.msra.mxu0 0
      %1653 = vmatprep.subr.bf16.mxu0 0
      %1654 = vmatpush1.bf16.msra.mxu0 0
      %1655 = vmatprep.subr.bf16.mxu0 0
      %1656 = vmatpush1.bf16.msra.mxu0 0
      %1657 = vmatprep.subr.bf16.mxu0 0
      %1658 = vmatpush1.bf16.msra.mxu0 %v1641
      %1659 = vmatprep.subr.bf16.mxu0 0
      %1660 = vmatpush2.bf16.msra.mxu0 0
      %1661 = vmatprep.subr.bf16.mxu0 0
      %1662 = vmatpush2.bf16.msra.mxu0 0
      %1663 = vmatprep.subr.bf16.mxu0 0
      %1664 = vmatpush2.bf16.msra.mxu0 0
      %1665 = vmatprep.subr.bf16.mxu0 0
      %1666 = vmatpush2.bf16.msra.mxu0 0
      %1667 = vmatprep.subr.bf16.mxu0 0
      %1668 = vmatpush2.bf16.msra.mxu0 0
      %1669 = vmatprep.subr.bf16.mxu0 0
      %1670 = vmatpush2.bf16.msra.mxu0 0
      %1671 = vmatprep.subr.bf16.mxu0 0
      %1672 = vmatpush2.bf16.msra.mxu0 0
      %1673 = vmatprep.subr.bf16.mxu0 0
      %1674 = vmatpush2.bf16.msra.mxu0 0
      %1675 = vmatprep.mubr.bf16.mxu0 0
      %1676 = vmatmul.mubr.bf16.gmra.mxu0 %v997
      %v1677 = vpop.f32.mrf.mxu0
      %v1678 = vadd.f32 0.0, %v1677
      %v1679 = vpop.f32.mrf.mxu0
      %v1680 = vpop.f32.mrf.mxu0
      %v1681 = vadd.f32 0.0, %v1680
      %v1682 = vpop.f32.mrf.mxu0
      %1683 = vmatprep.mubr.bf16.mxu0 0
      %1684 = vmatmul.mubr.bf16.gmra.mxu0 %v1000
      %v1685 = vpop.f32.mrf.mxu0
      %v1686 = vadd.f32 0.0, %v1685
      %v1687 = vpop.f32.mrf.mxu0
      %v1688 = vpop.f32.mrf.mxu0
      %v1689 = vadd.f32 0.0, %v1688
      %v1690 = vpop.f32.mrf.mxu0
      %1691 = vmatprep.mubr.bf16.mxu0 0
      %1692 = vmatmul.mubr.bf16.gmra.mxu0 %v1003
      %v1693 = vpop.f32.mrf.mxu0
      %v1694 = vadd.f32 0.0, %v1693
      %v1695 = vpop.f32.mrf.mxu0
      %v1696 = vpop.f32.mrf.mxu0
      %v1697 = vadd.f32 0.0, %v1696
      %v1698 = vpop.f32.mrf.mxu0
      %1699 = vmatprep.mubr.bf16.mxu0 0
      %1700 = vmatmul.mubr.bf16.gmra.mxu0 %v1006
      %v1701 = vpop.f32.mrf.mxu0
      %v1702 = vadd.f32 0.0, %v1701
      %v1703 = vpop.f32.mrf.mxu0
      %v1704 = vpop.f32.mrf.mxu0
      %v1705 = vadd.f32 0.0, %v1704
      %v1706 = vpop.f32.mrf.mxu0
      %1707 = vmatprep.mubr.bf16.mxu0 0
      %1708 = vmatmul.mubr.bf16.gmra.mxu0 %v1009
      %v1709 = vpop.f32.mrf.mxu0
      %v1710 = vadd.f32 0.0, %v1709
      %v1711 = vpop.f32.mrf.mxu0
      %v1712 = vpop.f32.mrf.mxu0
      %v1713 = vadd.f32 0.0, %v1712
      %v1714 = vpop.f32.mrf.mxu0
      %1715 = vmatprep.mubr.bf16.mxu0 0
      %1716 = vmatmul.mubr.bf16.gmra.mxu0 %v1012
      %v1717 = vpop.f32.mrf.mxu0
      %v1718 = vadd.f32 0.0, %v1717
      %v1719 = vpop.f32.mrf.mxu0
      %v1720 = vpop.f32.mrf.mxu0
      %v1721 = vadd.f32 0.0, %v1720
      %v1722 = vpop.f32.mrf.mxu0
      %1723 = vmatprep.mubr.bf16.mxu0 0
      %1724 = vmatmul.mubr.bf16.gmra.mxu0 %v1015
      %v1725 = vpop.f32.mrf.mxu0
      %v1726 = vadd.f32 0.0, %v1725
      %v1727 = vpop.f32.mrf.mxu0
      %v1728 = vpop.f32.mrf.mxu0
      %v1729 = vadd.f32 0.0, %v1728
      %v1730 = vpop.f32.mrf.mxu0
      %1731 = vmatprep.mubr.bf16.mxu0 0
      %1732 = vmatmul.mubr.bf16.gmra.mxu0 %v1018
      %v1733 = vpop.f32.mrf.mxu0
      %v1734 = vadd.f32 0.0, %v1733
      %v1735 = vpop.f32.mrf.mxu0
      %v1736 = vpop.f32.mrf.mxu0
      %v1737 = vadd.f32 0.0, %v1736
      %v1738 = vpop.f32.mrf.mxu0
      %1739 = vmatprep.mubr.bf16.mxu0 0
      %1740 = vmatmul.mubr.bf16.gmra.mxu0 %v1021
      %v1741 = vpop.f32.mrf.mxu0
      %v1742 = vadd.f32 0.0, %v1741
      %v1743 = vpop.f32.mrf.mxu0
      %v1744 = vpop.f32.mrf.mxu0
      %v1745 = vadd.f32 0.0, %v1744
      %v1746 = vpop.f32.mrf.mxu0
      %1747 = vmatprep.mubr.bf16.mxu0 0
      %1748 = vmatmul.mubr.bf16.gmra.mxu0 %v1024
      %v1749 = vpop.f32.mrf.mxu0
      %v1750 = vadd.f32 0.0, %v1749
      %v1751 = vpop.f32.mrf.mxu0
      %v1752 = vpop.f32.mrf.mxu0
      %v1753 = vadd.f32 0.0, %v1752
      %v1754 = vpop.f32.mrf.mxu0
      %1755 = vmatprep.mubr.bf16.mxu0 0
      %1756 = vmatmul.mubr.bf16.gmra.mxu0 %v1027
      %v1757 = vpop.f32.mrf.mxu0
      %v1758 = vadd.f32 0.0, %v1757
      %v1759 = vpop.f32.mrf.mxu0
      %v1760 = vpop.f32.mrf.mxu0
      %v1761 = vadd.f32 0.0, %v1760
      %v1762 = vpop.f32.mrf.mxu0
      %1763 = vmatprep.mubr.bf16.mxu0 0
      %1764 = vmatmul.mubr.bf16.gmra.mxu0 %v1030
      %v1765 = vpop.f32.mrf.mxu0
      %v1766 = vadd.f32 0.0, %v1765
      %v1767 = vpop.f32.mrf.mxu0
      %v1768 = vpop.f32.mrf.mxu0
      %v1769 = vadd.f32 0.0, %v1768
      %v1770 = vpop.f32.mrf.mxu0
      %1771 = vmatprep.mubr.bf16.mxu0 0
      %1772 = vmatmul.mubr.bf16.gmra.mxu0 %v1033
      %v1773 = vpop.f32.mrf.mxu0
      %v1774 = vadd.f32 0.0, %v1773
      %v1775 = vpop.f32.mrf.mxu0
      %v1776 = vpop.f32.mrf.mxu0
      %v1777 = vadd.f32 0.0, %v1776
      %v1778 = vpop.f32.mrf.mxu0
      %1779 = vmatprep.mubr.bf16.mxu0 0
      %1780 = vmatmul.mubr.bf16.gmra.mxu0 %v1036
      %v1781 = vpop.f32.mrf.mxu0
      %v1782 = vadd.f32 0.0, %v1781
      %v1783 = vpop.f32.mrf.mxu0
      %v1784 = vpop.f32.mrf.mxu0
      %v1785 = vadd.f32 0.0, %v1784
      %v1786 = vpop.f32.mrf.mxu0
      %1787 = vmatprep.mubr.bf16.mxu0 0
      %1788 = vmatmul.mubr.bf16.gmra.mxu0 %v1039
      %v1789 = vpop.f32.mrf.mxu0
      %v1790 = vadd.f32 0.0, %v1789
      %v1791 = vpop.f32.mrf.mxu0
      %v1792 = vpop.f32.mrf.mxu0
      %v1793 = vadd.f32 0.0, %v1792
      %v1794 = vpop.f32.mrf.mxu0
      %1795 = vmatprep.mubr.bf16.mxu0 0
      %1796 = vmatmul.mubr.bf16.gmra.mxu0 %v1638
      %v1797 = vpop.f32.mrf.mxu0
      %v1798 = vadd.f32 0.0, %v1797
      %v1799 = vpop.f32.mrf.mxu0
      %v1800 = vpop.f32.mrf.mxu0
      %v1801 = vadd.f32 0.0, %v1800
      %v1802 = vpop.f32.mrf.mxu0
      %1803 = vdwg.mxu0
      %v1804 = vadd.f32 %v1598, %v1678
      %v1805 = vadd.f32 %v1599, %v1681
      %v1806 = vadd.f32 %v1600, %v1686
      %v1807 = vadd.f32 %v1601, %v1689
      %v1808 = vadd.f32 %v1602, %v1694
      %v1809 = vadd.f32 %v1603, %v1697
      %v1810 = vadd.f32 %v1604, %v1702
      %v1811 = vadd.f32 %v1605, %v1705
      %v1812 = vadd.f32 %v1606, %v1710
      %v1813 = vadd.f32 %v1607, %v1713
      %v1814 = vadd.f32 %v1608, %v1718
      %v1815 = vadd.f32 %v1609, %v1721
      %v1816 = vadd.f32 %v1610, %v1726
      %v1817 = vadd.f32 %v1611, %v1729
      %v1818 = vadd.f32 %v1612, %v1734
      %v1819 = vadd.f32 %v1613, %v1737
      %v1820 = vadd.f32 %v1614, %v1742
      %v1821 = vadd.f32 %v1615, %v1745
      %v1822 = vadd.f32 %v1616, %v1750
      %v1823 = vadd.f32 %v1617, %v1753
      %v1824 = vadd.f32 %v1618, %v1758
      %v1825 = vadd.f32 %v1619, %v1761
      %v1826 = vadd.f32 %v1620, %v1766
      %v1827 = vadd.f32 %v1621, %v1769
      %v1828 = vadd.f32 %v1622, %v1774
      %v1829 = vadd.f32 %v1623, %v1777
      %v1830 = vadd.f32 %v1624, %v1782
      %v1831 = vadd.f32 %v1625, %v1785
      %v1832 = vadd.f32 %v1626, %v1790
      %v1833 = vadd.f32 %v1627, %v1793
      %v1834 = vadd.f32 %v1628, %v1798
      %v1835 = vadd.f32 %v1629, %v1801
      %v1837 = vshrl.u32 %v255, 16
      %v1839 = vrot.slane %v1837, 4
      %v1840 = vshll.u32 %v255, 16
      %v1842 = vrot.slane %v1840, 5
      %v1843 = vor.u32 %v1839, %v1842
      %v1844 = vrot.slane %v1843, 4
      %v1846 = vshll.u32 %v256, 16
      %v1848 = vrot.slane %v1846, 5
      %v1849 = vsel %vm264, %v1844, %v1848
      %v1850 = vshrl.u32 %v256, 16
      %v1852 = vrot.slane %v1850, 4
      %v1853 = vor.u32 %v1852, %v1848
      %v1854 = vrot.slane %v1853, 4
      %v1856 = vshll.u32 %v257, 16
      %v1858 = vrot.slane %v1856, 5
      %v1859 = vsel %vm264, %v1854, %v1858
      %s1860 = scalar_lea.vmem %s1, 16
      %v1861 = vld [vmem:[%s1860] sm:$0xf]
      %v1862 = vunpack.c.l.b16 %v1849
      %v1863 = vunpack.c.l.b16 %v1859
      %v1864 = vpack.c.b16 %v1863, %v1862
      %v1866 = vsel %vm699, %v1864, 0
      %v1869 = vsel %vm748, %v1861, 0
      %1871 = vmatprep.subr.bf16.mxu0 0
      %1872 = vmatpush1.bf16.msra.mxu0 0
      %1873 = vmatprep.subr.bf16.mxu0 0
      %1874 = vmatpush1.bf16.msra.mxu0 0
      %1875 = vmatprep.subr.bf16.mxu0 0
      %1876 = vmatpush1.bf16.msra.mxu0 0
      %1877 = vmatprep.subr.bf16.mxu0 0
      %1878 = vmatpush1.bf16.msra.mxu0 0
      %1879 = vmatprep.subr.bf16.mxu0 0
      %1880 = vmatpush1.bf16.msra.mxu0 0
      %1881 = vmatprep.subr.bf16.mxu0 0
      %1882 = vmatpush1.bf16.msra.mxu0 0
      %1883 = vmatprep.subr.bf16.mxu0 0
      %1884 = vmatpush1.bf16.msra.mxu0 0
      %1885 = vmatprep.subr.bf16.mxu0 0
      %1886 = vmatpush1.bf16.msra.mxu0 %v1869
      %1887 = vmatprep.subr.bf16.mxu0 0
      %1888 = vmatpush2.bf16.msra.mxu0 0
      %1889 = vmatprep.subr.bf16.mxu0 0
      %1890 = vmatpush2.bf16.msra.mxu0 0
      %1891 = vmatprep.subr.bf16.mxu0 0
      %1892 = vmatpush2.bf16.msra.mxu0 0
      %1893 = vmatprep.subr.bf16.mxu0 0
      %1894 = vmatpush2.bf16.msra.mxu0 0
      %1895 = vmatprep.subr.bf16.mxu0 0
      %1896 = vmatpush2.bf16.msra.mxu0 0
      %1897 = vmatprep.subr.bf16.mxu0 0
      %1898 = vmatpush2.bf16.msra.mxu0 0
      %1899 = vmatprep.subr.bf16.mxu0 0
      %1900 = vmatpush2.bf16.msra.mxu0 0
      %1901 = vmatprep.subr.bf16.mxu0 0
      %1902 = vmatpush2.bf16.msra.mxu0 0
      %1903 = vmatprep.mubr.bf16.mxu0 0
      %1904 = vmatmul.mubr.bf16.gmra.mxu0 %v704
      %v1905 = vpop.f32.mrf.mxu0
      %v1906 = vadd.f32 0.0, %v1905
      %v1907 = vpop.f32.mrf.mxu0
      %v1908 = vpop.f32.mrf.mxu0
      %v1909 = vadd.f32 0.0, %v1908
      %v1910 = vpop.f32.mrf.mxu0
      %1911 = vmatprep.mubr.bf16.mxu0 0
      %1912 = vmatmul.mubr.bf16.gmra.mxu0 %v707
      %v1913 = vpop.f32.mrf.mxu0
      %v1914 = vadd.f32 0.0, %v1913
      %v1915 = vpop.f32.mrf.mxu0
      %v1916 = vpop.f32.mrf.mxu0
      %v1917 = vadd.f32 0.0, %v1916
      %v1918 = vpop.f32.mrf.mxu0
      %1919 = vmatprep.mubr.bf16.mxu0 0
      %1920 = vmatmul.mubr.bf16.gmra.mxu0 %v710
      %v1921 = vpop.f32.mrf.mxu0
      %v1922 = vadd.f32 0.0, %v1921
      %v1923 = vpop.f32.mrf.mxu0
      %v1924 = vpop.f32.mrf.mxu0
      %v1925 = vadd.f32 0.0, %v1924
      %v1926 = vpop.f32.mrf.mxu0
      %1927 = vmatprep.mubr.bf16.mxu0 0
      %1928 = vmatmul.mubr.bf16.gmra.mxu0 %v713
      %v1929 = vpop.f32.mrf.mxu0
      %v1930 = vadd.f32 0.0, %v1929
      %v1931 = vpop.f32.mrf.mxu0
      %v1932 = vpop.f32.mrf.mxu0
      %v1933 = vadd.f32 0.0, %v1932
      %v1934 = vpop.f32.mrf.mxu0
      %1935 = vmatprep.mubr.bf16.mxu0 0
      %1936 = vmatmul.mubr.bf16.gmra.mxu0 %v716
      %v1937 = vpop.f32.mrf.mxu0
      %v1938 = vadd.f32 0.0, %v1937
      %v1939 = vpop.f32.mrf.mxu0
      %v1940 = vpop.f32.mrf.mxu0
      %v1941 = vadd.f32 0.0, %v1940
      %v1942 = vpop.f32.mrf.mxu0
      %1943 = vmatprep.mubr.bf16.mxu0 0
      %1944 = vmatmul.mubr.bf16.gmra.mxu0 %v719
      %v1945 = vpop.f32.mrf.mxu0
      %v1946 = vadd.f32 0.0, %v1945
      %v1947 = vpop.f32.mrf.mxu0
      %v1948 = vpop.f32.mrf.mxu0
      %v1949 = vadd.f32 0.0, %v1948
      %v1950 = vpop.f32.mrf.mxu0
      %1951 = vmatprep.mubr.bf16.mxu0 0
      %1952 = vmatmul.mubr.bf16.gmra.mxu0 %v722
      %v1953 = vpop.f32.mrf.mxu0
      %v1954 = vadd.f32 0.0, %v1953
      %v1955 = vpop.f32.mrf.mxu0
      %v1956 = vpop.f32.mrf.mxu0
      %v1957 = vadd.f32 0.0, %v1956
      %v1958 = vpop.f32.mrf.mxu0
      %1959 = vmatprep.mubr.bf16.mxu0 0
      %1960 = vmatmul.mubr.bf16.gmra.mxu0 %v725
      %v1961 = vpop.f32.mrf.mxu0
      %v1962 = vadd.f32 0.0, %v1961
      %v1963 = vpop.f32.mrf.mxu0
      %v1964 = vpop.f32.mrf.mxu0
      %v1965 = vadd.f32 0.0, %v1964
      %v1966 = vpop.f32.mrf.mxu0
      %1967 = vmatprep.mubr.bf16.mxu0 0
      %1968 = vmatmul.mubr.bf16.gmra.mxu0 %v728
      %v1969 = vpop.f32.mrf.mxu0
      %v1970 = vadd.f32 0.0, %v1969
      %v1971 = vpop.f32.mrf.mxu0
      %v1972 = vpop.f32.mrf.mxu0
      %v1973 = vadd.f32 0.0, %v1972
      %v1974 = vpop.f32.mrf.mxu0
      %1975 = vmatprep.mubr.bf16.mxu0 0
      %1976 = vmatmul.mubr.bf16.gmra.mxu0 %v731
      %v1977 = vpop.f32.mrf.mxu0
      %v1978 = vadd.f32 0.0, %v1977
      %v1979 = vpop.f32.mrf.mxu0
      %v1980 = vpop.f32.mrf.mxu0
      %v1981 = vadd.f32 0.0, %v1980
      %v1982 = vpop.f32.mrf.mxu0
      %1983 = vmatprep.mubr.bf16.mxu0 0
      %1984 = vmatmul.mubr.bf16.gmra.mxu0 %v734
      %v1985 = vpop.f32.mrf.mxu0
      %v1986 = vadd.f32 0.0, %v1985
      %v1987 = vpop.f32.mrf.mxu0
      %v1988 = vpop.f32.mrf.mxu0
      %v1989 = vadd.f32 0.0, %v1988
      %v1990 = vpop.f32.mrf.mxu0
      %1991 = vmatprep.mubr.bf16.mxu0 0
      %1992 = vmatmul.mubr.bf16.gmra.mxu0 %v737
      %v1993 = vpop.f32.mrf.mxu0
      %v1994 = vadd.f32 0.0, %v1993
      %v1995 = vpop.f32.mrf.mxu0
      %v1996 = vpop.f32.mrf.mxu0
      %v1997 = vadd.f32 0.0, %v1996
      %v1998 = vpop.f32.mrf.mxu0
      %1999 = vmatprep.mubr.bf16.mxu0 0
      %2000 = vmatmul.mubr.bf16.gmra.mxu0 %v740
      %v2001 = vpop.f32.mrf.mxu0
      %v2002 = vadd.f32 0.0, %v2001
      %v2003 = vpop.f32.mrf.mxu0
      %v2004 = vpop.f32.mrf.mxu0
      %v2005 = vadd.f32 0.0, %v2004
      %v2006 = vpop.f32.mrf.mxu0
      %2007 = vmatprep.mubr.bf16.mxu0 0
      %2008 = vmatmul.mubr.bf16.gmra.mxu0 %v743
      %v2009 = vpop.f32.mrf.mxu0
      %v2010 = vadd.f32 0.0, %v2009
      %v2011 = vpop.f32.mrf.mxu0
      %v2012 = vpop.f32.mrf.mxu0
      %v2013 = vadd.f32 0.0, %v2012
      %v2014 = vpop.f32.mrf.mxu0
      %2015 = vmatprep.mubr.bf16.mxu0 0
      %2016 = vmatmul.mubr.bf16.gmra.mxu0 %v746
      %v2017 = vpop.f32.mrf.mxu0
      %v2018 = vadd.f32 0.0, %v2017
      %v2019 = vpop.f32.mrf.mxu0
      %v2020 = vpop.f32.mrf.mxu0
      %v2021 = vadd.f32 0.0, %v2020
      %v2022 = vpop.f32.mrf.mxu0
      %2023 = vmatprep.mubr.bf16.mxu0 0
      %2024 = vmatmul.mubr.bf16.gmra.mxu0 %v1866
      %v2025 = vpop.f32.mrf.mxu0
      %v2026 = vadd.f32 0.0, %v2025
      %v2027 = vpop.f32.mrf.mxu0
      %v2028 = vpop.f32.mrf.mxu0
      %v2029 = vadd.f32 0.0, %v2028
      %v2030 = vpop.f32.mrf.mxu0
      %2031 = vdwg.mxu0
      %v2032 = vadd.f32 %v1804, %v1906
      %v2033 = vadd.f32 %v1805, %v1909
      %v2034 = vadd.f32 %v1806, %v1914
      %v2035 = vadd.f32 %v1807, %v1917
      %v2036 = vadd.f32 %v1808, %v1922
      %v2037 = vadd.f32 %v1809, %v1925
      %v2038 = vadd.f32 %v1810, %v1930
      %v2039 = vadd.f32 %v1811, %v1933
      %v2040 = vadd.f32 %v1812, %v1938
      %v2041 = vadd.f32 %v1813, %v1941
      %v2042 = vadd.f32 %v1814, %v1946
      %v2043 = vadd.f32 %v1815, %v1949
      %v2044 = vadd.f32 %v1816, %v1954
      %v2045 = vadd.f32 %v1817, %v1957
      %v2046 = vadd.f32 %v1818, %v1962
      %v2047 = vadd.f32 %v1819, %v1965
      %v2048 = vadd.f32 %v1820, %v1970
      %v2049 = vadd.f32 %v1821, %v1973
      %v2050 = vadd.f32 %v1822, %v1978
      %v2051 = vadd.f32 %v1823, %v1981
      %v2052 = vadd.f32 %v1824, %v1986
      %v2053 = vadd.f32 %v1825, %v1989
      %v2054 = vadd.f32 %v1826, %v1994
      %v2055 = vadd.f32 %v1827, %v1997
      %v2056 = vadd.f32 %v1828, %v2002
      %v2057 = vadd.f32 %v1829, %v2005
      %v2058 = vadd.f32 %v1830, %v2010
      %v2059 = vadd.f32 %v1831, %v2013
      %v2060 = vadd.f32 %v1832, %v2018
      %v2061 = vadd.f32 %v1833, %v2021
      %v2062 = vadd.f32 %v1834, %v2026
      %v2063 = vadd.f32 %v1835, %v2029
      %v2065 = vrot.slane %v255, 5
      %v2066 = vrot.slane %v2065, 4
      %v2067 = vrot.slane %v256, 5
      %v2068 = vsel %vm1223, %v2066, %v2067
      %v2069 = vrot.slane %v2067, 4
      %v2070 = vrot.slane %v257, 5
      %v2071 = vsel %vm1223, %v2069, %v2070
      %s2072 = scalar_lea.vmem %s1, 20
      %v2073 = vld [vmem:[%s2072] sm:$0xf]
      %v2074 = vunpack.c.l.b16 %v2068
      %v2075 = vunpack.c.l.b16 %v2071
      %v2076 = vpack.c.b16 %v2075, %v2074
      %v2078 = vsel %vm699, %v2076, 0
      %v2081 = vsel %vm748, %v2073, 0
      %2083 = vmatprep.subr.bf16.mxu0 0
      %2084 = vmatpush1.bf16.msra.mxu0 0
      %2085 = vmatprep.subr.bf16.mxu0 0
      %2086 = vmatpush1.bf16.msra.mxu0 0
      %2087 = vmatprep.subr.bf16.mxu0 0
      %2088 = vmatpush1.bf16.msra.mxu0 0
      %2089 = vmatprep.subr.bf16.mxu0 0
      %2090 = vmatpush1.bf16.msra.mxu0 0
      %2091 = vmatprep.subr.bf16.mxu0 0
      %2092 = vmatpush1.bf16.msra.mxu0 0
      %2093 = vmatprep.subr.bf16.mxu0 0
      %2094 = vmatpush1.bf16.msra.mxu0 0
      %2095 = vmatprep.subr.bf16.mxu0 0
      %2096 = vmatpush1.bf16.msra.mxu0 0
      %2097 = vmatprep.subr.bf16.mxu0 0
      %2098 = vmatpush1.bf16.msra.mxu0 %v2081
      %2099 = vmatprep.subr.bf16.mxu0 0
      %2100 = vmatpush2.bf16.msra.mxu0 0
      %2101 = vmatprep.subr.bf16.mxu0 0
      %2102 = vmatpush2.bf16.msra.mxu0 0
      %2103 = vmatprep.subr.bf16.mxu0 0
      %2104 = vmatpush2.bf16.msra.mxu0 0
      %2105 = vmatprep.subr.bf16.mxu0 0
      %2106 = vmatpush2.bf16.msra.mxu0 0
      %2107 = vmatprep.subr.bf16.mxu0 0
      %2108 = vmatpush2.bf16.msra.mxu0 0
      %2109 = vmatprep.subr.bf16.mxu0 0
      %2110 = vmatpush2.bf16.msra.mxu0 0
      %2111 = vmatprep.subr.bf16.mxu0 0
      %2112 = vmatpush2.bf16.msra.mxu0 0
      %2113 = vmatprep.subr.bf16.mxu0 0
      %2114 = vmatpush2.bf16.msra.mxu0 0
      %2115 = vmatprep.mubr.bf16.mxu0 0
      %2116 = vmatmul.mubr.bf16.gmra.mxu0 %v1390
      %v2117 = vpop.f32.mrf.mxu0
      %v2118 = vadd.f32 0.0, %v2117
      %v2119 = vpop.f32.mrf.mxu0
      %v2120 = vpop.f32.mrf.mxu0
      %v2121 = vadd.f32 0.0, %v2120
      %v2122 = vpop.f32.mrf.mxu0
      %2123 = vmatprep.mubr.bf16.mxu0 0
      %2124 = vmatmul.mubr.bf16.gmra.mxu0 %v1393
      %v2125 = vpop.f32.mrf.mxu0
      %v2126 = vadd.f32 0.0, %v2125
      %v2127 = vpop.f32.mrf.mxu0
      %v2128 = vpop.f32.mrf.mxu0
      %v2129 = vadd.f32 0.0, %v2128
      %v2130 = vpop.f32.mrf.mxu0
      %2131 = vmatprep.mubr.bf16.mxu0 0
      %2132 = vmatmul.mubr.bf16.gmra.mxu0 %v1396
      %v2133 = vpop.f32.mrf.mxu0
      %v2134 = vadd.f32 0.0, %v2133
      %v2135 = vpop.f32.mrf.mxu0
      %v2136 = vpop.f32.mrf.mxu0
      %v2137 = vadd.f32 0.0, %v2136
      %v2138 = vpop.f32.mrf.mxu0
      %2139 = vmatprep.mubr.bf16.mxu0 0
      %2140 = vmatmul.mubr.bf16.gmra.mxu0 %v1399
      %v2141 = vpop.f32.mrf.mxu0
      %v2142 = vadd.f32 0.0, %v2141
      %v2143 = vpop.f32.mrf.mxu0
      %v2144 = vpop.f32.mrf.mxu0
      %v2145 = vadd.f32 0.0, %v2144
      %v2146 = vpop.f32.mrf.mxu0
      %2147 = vmatprep.mubr.bf16.mxu0 0
      %2148 = vmatmul.mubr.bf16.gmra.mxu0 %v1402
      %v2149 = vpop.f32.mrf.mxu0
      %v2150 = vadd.f32 0.0, %v2149
      %v2151 = vpop.f32.mrf.mxu0
      %v2152 = vpop.f32.mrf.mxu0
      %v2153 = vadd.f32 0.0, %v2152
      %v2154 = vpop.f32.mrf.mxu0
      %2155 = vmatprep.mubr.bf16.mxu0 0
      %2156 = vmatmul.mubr.bf16.gmra.mxu0 %v1405
      %v2157 = vpop.f32.mrf.mxu0
      %v2158 = vadd.f32 0.0, %v2157
      %v2159 = vpop.f32.mrf.mxu0
      %v2160 = vpop.f32.mrf.mxu0
      %v2161 = vadd.f32 0.0, %v2160
      %v2162 = vpop.f32.mrf.mxu0
      %2163 = vmatprep.mubr.bf16.mxu0 0
      %2164 = vmatmul.mubr.bf16.gmra.mxu0 %v1408
      %v2165 = vpop.f32.mrf.mxu0
      %v2166 = vadd.f32 0.0, %v2165
      %v2167 = vpop.f32.mrf.mxu0
      %v2168 = vpop.f32.mrf.mxu0
      %v2169 = vadd.f32 0.0, %v2168
      %v2170 = vpop.f32.mrf.mxu0
      %2171 = vmatprep.mubr.bf16.mxu0 0
      %2172 = vmatmul.mubr.bf16.gmra.mxu0 %v1411
      %v2173 = vpop.f32.mrf.mxu0
      %v2174 = vadd.f32 0.0, %v2173
      %v2175 = vpop.f32.mrf.mxu0
      %v2176 = vpop.f32.mrf.mxu0
      %v2177 = vadd.f32 0.0, %v2176
      %v2178 = vpop.f32.mrf.mxu0
      %2179 = vmatprep.mubr.bf16.mxu0 0
      %2180 = vmatmul.mubr.bf16.gmra.mxu0 %v1414
      %v2181 = vpop.f32.mrf.mxu0
      %v2182 = vadd.f32 0.0, %v2181
      %v2183 = vpop.f32.mrf.mxu0
      %v2184 = vpop.f32.mrf.mxu0
      %v2185 = vadd.f32 0.0, %v2184
      %v2186 = vpop.f32.mrf.mxu0
      %2187 = vmatprep.mubr.bf16.mxu0 0
      %2188 = vmatmul.mubr.bf16.gmra.mxu0 %v1417
      %v2189 = vpop.f32.mrf.mxu0
      %v2190 = vadd.f32 0.0, %v2189
      %v2191 = vpop.f32.mrf.mxu0
      %v2192 = vpop.f32.mrf.mxu0
      %v2193 = vadd.f32 0.0, %v2192
      %v2194 = vpop.f32.mrf.mxu0
      %2195 = vmatprep.mubr.bf16.mxu0 0
      %2196 = vmatmul.mubr.bf16.gmra.mxu0 %v1420
      %v2197 = vpop.f32.mrf.mxu0
      %v2198 = vadd.f32 0.0, %v2197
      %v2199 = vpop.f32.mrf.mxu0
      %v2200 = vpop.f32.mrf.mxu0
      %v2201 = vadd.f32 0.0, %v2200
      %v2202 = vpop.f32.mrf.mxu0
      %2203 = vmatprep.mubr.bf16.mxu0 0
      %2204 = vmatmul.mubr.bf16.gmra.mxu0 %v1423
      %v2205 = vpop.f32.mrf.mxu0
      %v2206 = vadd.f32 0.0, %v2205
      %v2207 = vpop.f32.mrf.mxu0
      %v2208 = vpop.f32.mrf.mxu0
      %v2209 = vadd.f32 0.0, %v2208
      %v2210 = vpop.f32.mrf.mxu0
      %2211 = vmatprep.mubr.bf16.mxu0 0
      %2212 = vmatmul.mubr.bf16.gmra.mxu0 %v1426
      %v2213 = vpop.f32.mrf.mxu0
      %v2214 = vadd.f32 0.0, %v2213
      %v2215 = vpop.f32.mrf.mxu0
      %v2216 = vpop.f32.mrf.mxu0
      %v2217 = vadd.f32 0.0, %v2216
      %v2218 = vpop.f32.mrf.mxu0
      %2219 = vmatprep.mubr.bf16.mxu0 0
      %2220 = vmatmul.mubr.bf16.gmra.mxu0 %v1429
      %v2221 = vpop.f32.mrf.mxu0
      %v2222 = vadd.f32 0.0, %v2221
      %v2223 = vpop.f32.mrf.mxu0
      %v2224 = vpop.f32.mrf.mxu0
      %v2225 = vadd.f32 0.0, %v2224
      %v2226 = vpop.f32.mrf.mxu0
      %2227 = vmatprep.mubr.bf16.mxu0 0
      %2228 = vmatmul.mubr.bf16.gmra.mxu0 %v1432
      %v2229 = vpop.f32.mrf.mxu0
      %v2230 = vadd.f32 0.0, %v2229
      %v2231 = vpop.f32.mrf.mxu0
      %v2232 = vpop.f32.mrf.mxu0
      %v2233 = vadd.f32 0.0, %v2232
      %v2234 = vpop.f32.mrf.mxu0
      %2235 = vmatprep.mubr.bf16.mxu0 0
      %2236 = vmatmul.mubr.bf16.gmra.mxu0 %v2078
      %v2237 = vpop.f32.mrf.mxu0
      %v2238 = vadd.f32 0.0, %v2237
      %v2239 = vpop.f32.mrf.mxu0
      %v2240 = vpop.f32.mrf.mxu0
      %v2241 = vadd.f32 0.0, %v2240
      %v2242 = vpop.f32.mrf.mxu0
      %2243 = vdwg.mxu0
      %v2244 = vadd.f32 %v2032, %v2118
      %v2245 = vadd.f32 %v2033, %v2121
      %v2246 = vadd.f32 %v2034, %v2126
      %v2247 = vadd.f32 %v2035, %v2129
      %v2248 = vadd.f32 %v2036, %v2134
      %v2249 = vadd.f32 %v2037, %v2137
      %v2250 = vadd.f32 %v2038, %v2142
      %v2251 = vadd.f32 %v2039, %v2145
      %v2252 = vadd.f32 %v2040, %v2150
      %v2253 = vadd.f32 %v2041, %v2153
      %v2254 = vadd.f32 %v2042, %v2158
      %v2255 = vadd.f32 %v2043, %v2161
      %v2256 = vadd.f32 %v2044, %v2166
      %v2257 = vadd.f32 %v2045, %v2169
      %v2258 = vadd.f32 %v2046, %v2174
      %v2259 = vadd.f32 %v2047, %v2177
      %v2260 = vadd.f32 %v2048, %v2182
      %v2261 = vadd.f32 %v2049, %v2185
      %v2262 = vadd.f32 %v2050, %v2190
      %v2263 = vadd.f32 %v2051, %v2193
      %v2264 = vadd.f32 %v2052, %v2198
      %v2265 = vadd.f32 %v2053, %v2201
      %v2266 = vadd.f32 %v2054, %v2206
      %v2267 = vadd.f32 %v2055, %v2209
      %v2268 = vadd.f32 %v2056, %v2214
      %v2269 = vadd.f32 %v2057, %v2217
      %v2270 = vadd.f32 %v2058, %v2222
      %v2271 = vadd.f32 %v2059, %v2225
      %v2272 = vadd.f32 %v2060, %v2230
      %v2273 = vadd.f32 %v2061, %v2233
      %v2274 = vadd.f32 %v2062, %v2238
      %v2275 = vadd.f32 %v2063, %v2241
      %s2276 = scalar_lea.vmem %s1, 24
      %v2277 = vld [vmem:[%s2276] sm:$0xf]
      %v2280 = vunpack.c.l.b16 %v258
      %v2281 = vunpack.c.l.b16 %v259
      %v2282 = vpack.c.b16 %v2281, %v2280
      %v2284 = vsel %vm699, %v2282, 0
      %v2287 = vsel %vm748, %v2277, 0
      %2289 = vmatprep.subr.bf16.mxu0 0
      %2290 = vmatpush1.bf16.msra.mxu0 0
      %2291 = vmatprep.subr.bf16.mxu0 0
      %2292 = vmatpush1.bf16.msra.mxu0 0
      %2293 = vmatprep.subr.bf16.mxu0 0
      %2294 = vmatpush1.bf16.msra.mxu0 0
      %2295 = vmatprep.subr.bf16.mxu0 0
      %2296 = vmatpush1.bf16.msra.mxu0 0
      %2297 = vmatprep.subr.bf16.mxu0 0
      %2298 = vmatpush1.bf16.msra.mxu0 0
      %2299 = vmatprep.subr.bf16.mxu0 0
      %2300 = vmatpush1.bf16.msra.mxu0 0
      %2301 = vmatprep.subr.bf16.mxu0 0
      %2302 = vmatpush1.bf16.msra.mxu0 0
      %2303 = vmatprep.subr.bf16.mxu0 0
      %2304 = vmatpush1.bf16.msra.mxu0 %v2287
      %2305 = vmatprep.subr.bf16.mxu0 0
      %2306 = vmatpush2.bf16.msra.mxu0 0
      %2307 = vmatprep.subr.bf16.mxu0 0
      %2308 = vmatpush2.bf16.msra.mxu0 0
      %2309 = vmatprep.subr.bf16.mxu0 0
      %2310 = vmatpush2.bf16.msra.mxu0 0
      %2311 = vmatprep.subr.bf16.mxu0 0
      %2312 = vmatpush2.bf16.msra.mxu0 0
      %2313 = vmatprep.subr.bf16.mxu0 0
      %2314 = vmatpush2.bf16.msra.mxu0 0
      %2315 = vmatprep.subr.bf16.mxu0 0
      %2316 = vmatpush2.bf16.msra.mxu0 0
      %2317 = vmatprep.subr.bf16.mxu0 0
      %2318 = vmatpush2.bf16.msra.mxu0 0
      %2319 = vmatprep.subr.bf16.mxu0 0
      %2320 = vmatpush2.bf16.msra.mxu0 0
      %2321 = vmatprep.mubr.bf16.mxu0 0
      %2322 = vmatmul.mubr.bf16.gmra.mxu0 %v1000
      %v2323 = vpop.f32.mrf.mxu0
      %v2324 = vadd.f32 0.0, %v2323
      %v2325 = vpop.f32.mrf.mxu0
      %v2326 = vpop.f32.mrf.mxu0
      %v2327 = vadd.f32 0.0, %v2326
      %v2328 = vpop.f32.mrf.mxu0
      %2329 = vmatprep.mubr.bf16.mxu0 0
      %2330 = vmatmul.mubr.bf16.gmra.mxu0 %v1003
      %v2331 = vpop.f32.mrf.mxu0
      %v2332 = vadd.f32 0.0, %v2331
      %v2333 = vpop.f32.mrf.mxu0
      %v2334 = vpop.f32.mrf.mxu0
      %v2335 = vadd.f32 0.0, %v2334
      %v2336 = vpop.f32.mrf.mxu0
      %2337 = vmatprep.mubr.bf16.mxu0 0
      %2338 = vmatmul.mubr.bf16.gmra.mxu0 %v1006
      %v2339 = vpop.f32.mrf.mxu0
      %v2340 = vadd.f32 0.0, %v2339
      %v2341 = vpop.f32.mrf.mxu0
      %v2342 = vpop.f32.mrf.mxu0
      %v2343 = vadd.f32 0.0, %v2342
      %v2344 = vpop.f32.mrf.mxu0
      %2345 = vmatprep.mubr.bf16.mxu0 0
      %2346 = vmatmul.mubr.bf16.gmra.mxu0 %v1009
      %v2347 = vpop.f32.mrf.mxu0
      %v2348 = vadd.f32 0.0, %v2347
      %v2349 = vpop.f32.mrf.mxu0
      %v2350 = vpop.f32.mrf.mxu0
      %v2351 = vadd.f32 0.0, %v2350
      %v2352 = vpop.f32.mrf.mxu0
      %2353 = vmatprep.mubr.bf16.mxu0 0
      %2354 = vmatmul.mubr.bf16.gmra.mxu0 %v1012
      %v2355 = vpop.f32.mrf.mxu0
      %v2356 = vadd.f32 0.0, %v2355
      %v2357 = vpop.f32.mrf.mxu0
      %v2358 = vpop.f32.mrf.mxu0
      %v2359 = vadd.f32 0.0, %v2358
      %v2360 = vpop.f32.mrf.mxu0
      %2361 = vmatprep.mubr.bf16.mxu0 0
      %2362 = vmatmul.mubr.bf16.gmra.mxu0 %v1015
      %v2363 = vpop.f32.mrf.mxu0
      %v2364 = vadd.f32 0.0, %v2363
      %v2365 = vpop.f32.mrf.mxu0
      %v2366 = vpop.f32.mrf.mxu0
      %v2367 = vadd.f32 0.0, %v2366
      %v2368 = vpop.f32.mrf.mxu0
      %2369 = vmatprep.mubr.bf16.mxu0 0
      %2370 = vmatmul.mubr.bf16.gmra.mxu0 %v1018
      %v2371 = vpop.f32.mrf.mxu0
      %v2372 = vadd.f32 0.0, %v2371
      %v2373 = vpop.f32.mrf.mxu0
      %v2374 = vpop.f32.mrf.mxu0
      %v2375 = vadd.f32 0.0, %v2374
      %v2376 = vpop.f32.mrf.mxu0
      %2377 = vmatprep.mubr.bf16.mxu0 0
      %2378 = vmatmul.mubr.bf16.gmra.mxu0 %v1021
      %v2379 = vpop.f32.mrf.mxu0
      %v2380 = vadd.f32 0.0, %v2379
      %v2381 = vpop.f32.mrf.mxu0
      %v2382 = vpop.f32.mrf.mxu0
      %v2383 = vadd.f32 0.0, %v2382
      %v2384 = vpop.f32.mrf.mxu0
      %2385 = vmatprep.mubr.bf16.mxu0 0
      %2386 = vmatmul.mubr.bf16.gmra.mxu0 %v1024
      %v2387 = vpop.f32.mrf.mxu0
      %v2388 = vadd.f32 0.0, %v2387
      %v2389 = vpop.f32.mrf.mxu0
      %v2390 = vpop.f32.mrf.mxu0
      %v2391 = vadd.f32 0.0, %v2390
      %v2392 = vpop.f32.mrf.mxu0
      %2393 = vmatprep.mubr.bf16.mxu0 0
      %2394 = vmatmul.mubr.bf16.gmra.mxu0 %v1027
      %v2395 = vpop.f32.mrf.mxu0
      %v2396 = vadd.f32 0.0, %v2395
      %v2397 = vpop.f32.mrf.mxu0
      %v2398 = vpop.f32.mrf.mxu0
      %v2399 = vadd.f32 0.0, %v2398
      %v2400 = vpop.f32.mrf.mxu0
      %2401 = vmatprep.mubr.bf16.mxu0 0
      %2402 = vmatmul.mubr.bf16.gmra.mxu0 %v1030
      %v2403 = vpop.f32.mrf.mxu0
      %v2404 = vadd.f32 0.0, %v2403
      %v2405 = vpop.f32.mrf.mxu0
      %v2406 = vpop.f32.mrf.mxu0
      %v2407 = vadd.f32 0.0, %v2406
      %v2408 = vpop.f32.mrf.mxu0
      %2409 = vmatprep.mubr.bf16.mxu0 0
      %2410 = vmatmul.mubr.bf16.gmra.mxu0 %v1033
      %v2411 = vpop.f32.mrf.mxu0
      %v2412 = vadd.f32 0.0, %v2411
      %v2413 = vpop.f32.mrf.mxu0
      %v2414 = vpop.f32.mrf.mxu0
      %v2415 = vadd.f32 0.0, %v2414
      %v2416 = vpop.f32.mrf.mxu0
      %2417 = vmatprep.mubr.bf16.mxu0 0
      %2418 = vmatmul.mubr.bf16.gmra.mxu0 %v1036
      %v2419 = vpop.f32.mrf.mxu0
      %v2420 = vadd.f32 0.0, %v2419
      %v2421 = vpop.f32.mrf.mxu0
      %v2422 = vpop.f32.mrf.mxu0
      %v2423 = vadd.f32 0.0, %v2422
      %v2424 = vpop.f32.mrf.mxu0
      %2425 = vmatprep.mubr.bf16.mxu0 0
      %2426 = vmatmul.mubr.bf16.gmra.mxu0 %v1039
      %v2427 = vpop.f32.mrf.mxu0
      %v2428 = vadd.f32 0.0, %v2427
      %v2429 = vpop.f32.mrf.mxu0
      %v2430 = vpop.f32.mrf.mxu0
      %v2431 = vadd.f32 0.0, %v2430
      %v2432 = vpop.f32.mrf.mxu0
      %2433 = vmatprep.mubr.bf16.mxu0 0
      %2434 = vmatmul.mubr.bf16.gmra.mxu0 %v1638
      %v2435 = vpop.f32.mrf.mxu0
      %v2436 = vadd.f32 0.0, %v2435
      %v2437 = vpop.f32.mrf.mxu0
      %v2438 = vpop.f32.mrf.mxu0
      %v2439 = vadd.f32 0.0, %v2438
      %v2440 = vpop.f32.mrf.mxu0
      %2441 = vmatprep.mubr.bf16.mxu0 0
      %2442 = vmatmul.mubr.bf16.gmra.mxu0 %v2284
      %v2443 = vpop.f32.mrf.mxu0
      %v2444 = vadd.f32 0.0, %v2443
      %v2445 = vpop.f32.mrf.mxu0
      %v2446 = vpop.f32.mrf.mxu0
      %v2447 = vadd.f32 0.0, %v2446
      %v2448 = vpop.f32.mrf.mxu0
      %2449 = vdwg.mxu0
      %v2450 = vadd.f32 %v2244, %v2324
      %v2451 = vadd.f32 %v2245, %v2327
      %v2452 = vadd.f32 %v2246, %v2332
      %v2453 = vadd.f32 %v2247, %v2335
      %v2454 = vadd.f32 %v2248, %v2340
      %v2455 = vadd.f32 %v2249, %v2343
      %v2456 = vadd.f32 %v2250, %v2348
      %v2457 = vadd.f32 %v2251, %v2351
      %v2458 = vadd.f32 %v2252, %v2356
      %v2459 = vadd.f32 %v2253, %v2359
      %v2460 = vadd.f32 %v2254, %v2364
      %v2461 = vadd.f32 %v2255, %v2367
      %v2462 = vadd.f32 %v2256, %v2372
      %v2463 = vadd.f32 %v2257, %v2375
      %v2464 = vadd.f32 %v2258, %v2380
      %v2465 = vadd.f32 %v2259, %v2383
      %v2466 = vadd.f32 %v2260, %v2388
      %v2467 = vadd.f32 %v2261, %v2391
      %v2468 = vadd.f32 %v2262, %v2396
      %v2469 = vadd.f32 %v2263, %v2399
      %v2470 = vadd.f32 %v2264, %v2404
      %v2471 = vadd.f32 %v2265, %v2407
      %v2472 = vadd.f32 %v2266, %v2412
      %v2473 = vadd.f32 %v2267, %v2415
      %v2474 = vadd.f32 %v2268, %v2420
      %v2475 = vadd.f32 %v2269, %v2423
      %v2476 = vadd.f32 %v2270, %v2428
      %v2477 = vadd.f32 %v2271, %v2431
      %v2478 = vadd.f32 %v2272, %v2436
      %v2479 = vadd.f32 %v2273, %v2439
      %v2480 = vadd.f32 %v2274, %v2444
      %v2481 = vadd.f32 %v2275, %v2447
      %v2483 = vshrl.u32 %v258, 16
      %v2485 = vrot.slane %v2483, 4
      %v2486 = vshll.u32 %v258, 16
      %v2488 = vrot.slane %v2486, 5
      %v2489 = vor.u32 %v2485, %v2488
      %v2490 = vrot.slane %v2489, 4
      %v2492 = vshll.u32 %v259, 16
      %v2494 = vrot.slane %v2492, 5
      %v2495 = vsel %vm264, %v2490, %v2494
      %v2496 = vshrl.u32 %v259, 16
      %v2498 = vrot.slane %v2496, 4
      %v2499 = vor.u32 %v2498, %v2494
      %v2500 = vrot.slane %v2499, 4
      %v2502 = vshll.u32 %v260, 16
      %v2504 = vrot.slane %v2502, 5
      %v2505 = vsel %vm264, %v2500, %v2504
      %s2506 = scalar_lea.vmem %s1, 28
      %v2507 = vld [vmem:[%s2506] sm:$0xf]
      %v2508 = vunpack.c.l.b16 %v2495
      %v2509 = vunpack.c.l.b16 %v2505
      %v2510 = vpack.c.b16 %v2509, %v2508
      %v2512 = vsel %vm699, %v2510, 0
      %v2515 = vsel %vm748, %v2507, 0
      %2517 = vmatprep.subr.bf16.mxu0 0
      %2518 = vmatpush1.bf16.msra.mxu0 0
      %2519 = vmatprep.subr.bf16.mxu0 0
      %2520 = vmatpush1.bf16.msra.mxu0 0
      %2521 = vmatprep.subr.bf16.mxu0 0
      %2522 = vmatpush1.bf16.msra.mxu0 0
      %2523 = vmatprep.subr.bf16.mxu0 0
      %2524 = vmatpush1.bf16.msra.mxu0 0
      %2525 = vmatprep.subr.bf16.mxu0 0
      %2526 = vmatpush1.bf16.msra.mxu0 0
      %2527 = vmatprep.subr.bf16.mxu0 0
      %2528 = vmatpush1.bf16.msra.mxu0 0
      %2529 = vmatprep.subr.bf16.mxu0 0
      %2530 = vmatpush1.bf16.msra.mxu0 0
      %2531 = vmatprep.subr.bf16.mxu0 0
      %2532 = vmatpush1.bf16.msra.mxu0 %v2515
      %2533 = vmatprep.subr.bf16.mxu0 0
      %2534 = vmatpush2.bf16.msra.mxu0 0
      %2535 = vmatprep.subr.bf16.mxu0 0
      %2536 = vmatpush2.bf16.msra.mxu0 0
      %2537 = vmatprep.subr.bf16.mxu0 0
      %2538 = vmatpush2.bf16.msra.mxu0 0
      %2539 = vmatprep.subr.bf16.mxu0 0
      %2540 = vmatpush2.bf16.msra.mxu0 0
      %2541 = vmatprep.subr.bf16.mxu0 0
      %2542 = vmatpush2.bf16.msra.mxu0 0
      %2543 = vmatprep.subr.bf16.mxu0 0
      %2544 = vmatpush2.bf16.msra.mxu0 0
      %2545 = vmatprep.subr.bf16.mxu0 0
      %2546 = vmatpush2.bf16.msra.mxu0 0
      %2547 = vmatprep.subr.bf16.mxu0 0
      %2548 = vmatpush2.bf16.msra.mxu0 0
      %2549 = vmatprep.mubr.bf16.mxu0 0
      %2550 = vmatmul.mubr.bf16.gmra.mxu0 %v707
      %v2551 = vpop.f32.mrf.mxu0
      %v2552 = vadd.f32 0.0, %v2551
      %v2553 = vpop.f32.mrf.mxu0
      %v2554 = vpop.f32.mrf.mxu0
      %v2555 = vadd.f32 0.0, %v2554
      %v2556 = vpop.f32.mrf.mxu0
      %2557 = vmatprep.mubr.bf16.mxu0 0
      %2558 = vmatmul.mubr.bf16.gmra.mxu0 %v710
      %v2559 = vpop.f32.mrf.mxu0
      %v2560 = vadd.f32 0.0, %v2559
      %v2561 = vpop.f32.mrf.mxu0
      %v2562 = vpop.f32.mrf.mxu0
      %v2563 = vadd.f32 0.0, %v2562
      %v2564 = vpop.f32.mrf.mxu0
      %2565 = vmatprep.mubr.bf16.mxu0 0
      %2566 = vmatmul.mubr.bf16.gmra.mxu0 %v713
      %v2567 = vpop.f32.mrf.mxu0
      %v2568 = vadd.f32 0.0, %v2567
      %v2569 = vpop.f32.mrf.mxu0
      %v2570 = vpop.f32.mrf.mxu0
      %v2571 = vadd.f32 0.0, %v2570
      %v2572 = vpop.f32.mrf.mxu0
      %2573 = vmatprep.mubr.bf16.mxu0 0
      %2574 = vmatmul.mubr.bf16.gmra.mxu0 %v716
      %v2575 = vpop.f32.mrf.mxu0
      %v2576 = vadd.f32 0.0, %v2575
      %v2577 = vpop.f32.mrf.mxu0
      %v2578 = vpop.f32.mrf.mxu0
      %v2579 = vadd.f32 0.0, %v2578
      %v2580 = vpop.f32.mrf.mxu0
      %2581 = vmatprep.mubr.bf16.mxu0 0
      %2582 = vmatmul.mubr.bf16.gmra.mxu0 %v719
      %v2583 = vpop.f32.mrf.mxu0
      %v2584 = vadd.f32 0.0, %v2583
      %v2585 = vpop.f32.mrf.mxu0
      %v2586 = vpop.f32.mrf.mxu0
      %v2587 = vadd.f32 0.0, %v2586
      %v2588 = vpop.f32.mrf.mxu0
      %2589 = vmatprep.mubr.bf16.mxu0 0
      %2590 = vmatmul.mubr.bf16.gmra.mxu0 %v722
      %v2591 = vpop.f32.mrf.mxu0
      %v2592 = vadd.f32 0.0, %v2591
      %v2593 = vpop.f32.mrf.mxu0
      %v2594 = vpop.f32.mrf.mxu0
      %v2595 = vadd.f32 0.0, %v2594
      %v2596 = vpop.f32.mrf.mxu0
      %2597 = vmatprep.mubr.bf16.mxu0 0
      %2598 = vmatmul.mubr.bf16.gmra.mxu0 %v725
      %v2599 = vpop.f32.mrf.mxu0
      %v2600 = vadd.f32 0.0, %v2599
      %v2601 = vpop.f32.mrf.mxu0
      %v2602 = vpop.f32.mrf.mxu0
      %v2603 = vadd.f32 0.0, %v2602
      %v2604 = vpop.f32.mrf.mxu0
      %2605 = vmatprep.mubr.bf16.mxu0 0
      %2606 = vmatmul.mubr.bf16.gmra.mxu0 %v728
      %v2607 = vpop.f32.mrf.mxu0
      %v2608 = vadd.f32 0.0, %v2607
      %v2609 = vpop.f32.mrf.mxu0
      %v2610 = vpop.f32.mrf.mxu0
      %v2611 = vadd.f32 0.0, %v2610
      %v2612 = vpop.f32.mrf.mxu0
      %2613 = vmatprep.mubr.bf16.mxu0 0
      %2614 = vmatmul.mubr.bf16.gmra.mxu0 %v731
      %v2615 = vpop.f32.mrf.mxu0
      %v2616 = vadd.f32 0.0, %v2615
      %v2617 = vpop.f32.mrf.mxu0
      %v2618 = vpop.f32.mrf.mxu0
      %v2619 = vadd.f32 0.0, %v2618
      %v2620 = vpop.f32.mrf.mxu0
      %2621 = vmatprep.mubr.bf16.mxu0 0
      %2622 = vmatmul.mubr.bf16.gmra.mxu0 %v734
      %v2623 = vpop.f32.mrf.mxu0
      %v2624 = vadd.f32 0.0, %v2623
      %v2625 = vpop.f32.mrf.mxu0
      %v2626 = vpop.f32.mrf.mxu0
      %v2627 = vadd.f32 0.0, %v2626
      %v2628 = vpop.f32.mrf.mxu0
      %2629 = vmatprep.mubr.bf16.mxu0 0
      %2630 = vmatmul.mubr.bf16.gmra.mxu0 %v737
      %v2631 = vpop.f32.mrf.mxu0
      %v2632 = vadd.f32 0.0, %v2631
      %v2633 = vpop.f32.mrf.mxu0
      %v2634 = vpop.f32.mrf.mxu0
      %v2635 = vadd.f32 0.0, %v2634
      %v2636 = vpop.f32.mrf.mxu0
      %2637 = vmatprep.mubr.bf16.mxu0 0
      %2638 = vmatmul.mubr.bf16.gmra.mxu0 %v740
      %v2639 = vpop.f32.mrf.mxu0
      %v2640 = vadd.f32 0.0, %v2639
      %v2641 = vpop.f32.mrf.mxu0
      %v2642 = vpop.f32.mrf.mxu0
      %v2643 = vadd.f32 0.0, %v2642
      %v2644 = vpop.f32.mrf.mxu0
      %2645 = vmatprep.mubr.bf16.mxu0 0
      %2646 = vmatmul.mubr.bf16.gmra.mxu0 %v743
      %v2647 = vpop.f32.mrf.mxu0
      %v2648 = vadd.f32 0.0, %v2647
      %v2649 = vpop.f32.mrf.mxu0
      %v2650 = vpop.f32.mrf.mxu0
      %v2651 = vadd.f32 0.0, %v2650
      %v2652 = vpop.f32.mrf.mxu0
      %2653 = vmatprep.mubr.bf16.mxu0 0
      %2654 = vmatmul.mubr.bf16.gmra.mxu0 %v746
      %v2655 = vpop.f32.mrf.mxu0
      %v2656 = vadd.f32 0.0, %v2655
      %v2657 = vpop.f32.mrf.mxu0
      %v2658 = vpop.f32.mrf.mxu0
      %v2659 = vadd.f32 0.0, %v2658
      %v2660 = vpop.f32.mrf.mxu0
      %2661 = vmatprep.mubr.bf16.mxu0 0
      %2662 = vmatmul.mubr.bf16.gmra.mxu0 %v1866
      %v2663 = vpop.f32.mrf.mxu0
      %v2664 = vadd.f32 0.0, %v2663
      %v2665 = vpop.f32.mrf.mxu0
      %v2666 = vpop.f32.mrf.mxu0
      %v2667 = vadd.f32 0.0, %v2666
      %v2668 = vpop.f32.mrf.mxu0
      %2669 = vmatprep.mubr.bf16.mxu0 0
      %2670 = vmatmul.mubr.bf16.gmra.mxu0 %v2512
      %v2671 = vpop.f32.mrf.mxu0
      %v2672 = vadd.f32 0.0, %v2671
      %v2673 = vpop.f32.mrf.mxu0
      %v2674 = vpop.f32.mrf.mxu0
      %v2675 = vadd.f32 0.0, %v2674
      %v2676 = vpop.f32.mrf.mxu0
      %2677 = vdwg.mxu0
      %v2678 = vadd.f32 %v2450, %v2552
      %v2679 = vadd.f32 %v2451, %v2555
      %v2680 = vadd.f32 %v2452, %v2560
      %v2681 = vadd.f32 %v2453, %v2563
      %v2682 = vadd.f32 %v2454, %v2568
      %v2683 = vadd.f32 %v2455, %v2571
      %v2684 = vadd.f32 %v2456, %v2576
      %v2685 = vadd.f32 %v2457, %v2579
      %v2686 = vadd.f32 %v2458, %v2584
      %v2687 = vadd.f32 %v2459, %v2587
      %v2688 = vadd.f32 %v2460, %v2592
      %v2689 = vadd.f32 %v2461, %v2595
      %v2690 = vadd.f32 %v2462, %v2600
      %v2691 = vadd.f32 %v2463, %v2603
      %v2692 = vadd.f32 %v2464, %v2608
      %v2693 = vadd.f32 %v2465, %v2611
      %v2694 = vadd.f32 %v2466, %v2616
      %v2695 = vadd.f32 %v2467, %v2619
      %v2696 = vadd.f32 %v2468, %v2624
      %v2697 = vadd.f32 %v2469, %v2627
      %v2698 = vadd.f32 %v2470, %v2632
      %v2699 = vadd.f32 %v2471, %v2635
      %v2700 = vadd.f32 %v2472, %v2640
      %v2701 = vadd.f32 %v2473, %v2643
      %v2702 = vadd.f32 %v2474, %v2648
      %v2703 = vadd.f32 %v2475, %v2651
      %v2704 = vadd.f32 %v2476, %v2656
      %v2705 = vadd.f32 %v2477, %v2659
      %v2706 = vadd.f32 %v2478, %v2664
      %v2707 = vadd.f32 %v2479, %v2667
      %v2708 = vadd.f32 %v2480, %v2672
      %v2709 = vadd.f32 %v2481, %v2675
      %v2711 = vrot.slane %v258, 5
      %v2712 = vrot.slane %v2711, 4
      %v2713 = vrot.slane %v259, 5
      %v2714 = vsel %vm1223, %v2712, %v2713
      %v2715 = vrot.slane %v2713, 4
      %v2716 = vrot.slane %v260, 5
      %v2717 = vsel %vm1223, %v2715, %v2716
      %s2718 = scalar_lea.vmem %s1, 32
      %v2719 = vld [vmem:[%s2718] sm:$0xf]
      %v2720 = vunpack.c.l.b16 %v2714
      %v2721 = vunpack.c.l.b16 %v2717
      %v2722 = vpack.c.b16 %v2721, %v2720
      %v2724 = vsel %vm699, %v2722, 0
      %v2727 = vsel %vm748, %v2719, 0
      %2729 = vmatprep.subr.bf16.mxu0 0
      %2730 = vmatpush1.bf16.msra.mxu0 0
      %2731 = vmatprep.subr.bf16.mxu0 0
      %2732 = vmatpush1.bf16.msra.mxu0 0
      %2733 = vmatprep.subr.bf16.mxu0 0
      %2734 = vmatpush1.bf16.msra.mxu0 0
      %2735 = vmatprep.subr.bf16.mxu0 0
      %2736 = vmatpush1.bf16.msra.mxu0 0
      %2737 = vmatprep.subr.bf16.mxu0 0
      %2738 = vmatpush1.bf16.msra.mxu0 0
      %2739 = vmatprep.subr.bf16.mxu0 0
      %2740 = vmatpush1.bf16.msra.mxu0 0
      %2741 = vmatprep.subr.bf16.mxu0 0
      %2742 = vmatpush1.bf16.msra.mxu0 0
      %2743 = vmatprep.subr.bf16.mxu0 0
      %2744 = vmatpush1.bf16.msra.mxu0 %v2727
      %2745 = vmatprep.subr.bf16.mxu0 0
      %2746 = vmatpush2.bf16.msra.mxu0 0
      %2747 = vmatprep.subr.bf16.mxu0 0
      %2748 = vmatpush2.bf16.msra.mxu0 0
      %2749 = vmatprep.subr.bf16.mxu0 0
      %2750 = vmatpush2.bf16.msra.mxu0 0
      %2751 = vmatprep.subr.bf16.mxu0 0
      %2752 = vmatpush2.bf16.msra.mxu0 0
      %2753 = vmatprep.subr.bf16.mxu0 0
      %2754 = vmatpush2.bf16.msra.mxu0 0
      %2755 = vmatprep.subr.bf16.mxu0 0
      %2756 = vmatpush2.bf16.msra.mxu0 0
      %2757 = vmatprep.subr.bf16.mxu0 0
      %2758 = vmatpush2.bf16.msra.mxu0 0
      %2759 = vmatprep.subr.bf16.mxu0 0
      %2760 = vmatpush2.bf16.msra.mxu0 0
      %2761 = vmatprep.mubr.bf16.mxu0 0
      %2762 = vmatmul.mubr.bf16.gmra.mxu0 %v1393
      %v2763 = vpop.f32.mrf.mxu0
      %v2764 = vadd.f32 0.0, %v2763
      %v2765 = vpop.f32.mrf.mxu0
      %v2766 = vpop.f32.mrf.mxu0
      %v2767 = vadd.f32 0.0, %v2766
      %v2768 = vpop.f32.mrf.mxu0
      %2769 = vmatprep.mubr.bf16.mxu0 0
      %2770 = vmatmul.mubr.bf16.gmra.mxu0 %v1396
      %v2771 = vpop.f32.mrf.mxu0
      %v2772 = vadd.f32 0.0, %v2771
      %v2773 = vpop.f32.mrf.mxu0
      %v2774 = vpop.f32.mrf.mxu0
      %v2775 = vadd.f32 0.0, %v2774
      %v2776 = vpop.f32.mrf.mxu0
      %2777 = vmatprep.mubr.bf16.mxu0 0
      %2778 = vmatmul.mubr.bf16.gmra.mxu0 %v1399
      %v2779 = vpop.f32.mrf.mxu0
      %v2780 = vadd.f32 0.0, %v2779
      %v2781 = vpop.f32.mrf.mxu0
      %v2782 = vpop.f32.mrf.mxu0
      %v2783 = vadd.f32 0.0, %v2782
      %v2784 = vpop.f32.mrf.mxu0
      %2785 = vmatprep.mubr.bf16.mxu0 0
      %2786 = vmatmul.mubr.bf16.gmra.mxu0 %v1402
      %v2787 = vpop.f32.mrf.mxu0
      %v2788 = vadd.f32 0.0, %v2787
      %v2789 = vpop.f32.mrf.mxu0
      %v2790 = vpop.f32.mrf.mxu0
      %v2791 = vadd.f32 0.0, %v2790
      %v2792 = vpop.f32.mrf.mxu0
      %2793 = vmatprep.mubr.bf16.mxu0 0
      %2794 = vmatmul.mubr.bf16.gmra.mxu0 %v1405
      %v2795 = vpop.f32.mrf.mxu0
      %v2796 = vadd.f32 0.0, %v2795
      %v2797 = vpop.f32.mrf.mxu0
      %v2798 = vpop.f32.mrf.mxu0
      %v2799 = vadd.f32 0.0, %v2798
      %v2800 = vpop.f32.mrf.mxu0
      %2801 = vmatprep.mubr.bf16.mxu0 0
      %2802 = vmatmul.mubr.bf16.gmra.mxu0 %v1408
      %v2803 = vpop.f32.mrf.mxu0
      %v2804 = vadd.f32 0.0, %v2803
      %v2805 = vpop.f32.mrf.mxu0
      %v2806 = vpop.f32.mrf.mxu0
      %v2807 = vadd.f32 0.0, %v2806
      %v2808 = vpop.f32.mrf.mxu0
      %2809 = vmatprep.mubr.bf16.mxu0 0
      %2810 = vmatmul.mubr.bf16.gmra.mxu0 %v1411
      %v2811 = vpop.f32.mrf.mxu0
      %v2812 = vadd.f32 0.0, %v2811
      %v2813 = vpop.f32.mrf.mxu0
      %v2814 = vpop.f32.mrf.mxu0
      %v2815 = vadd.f32 0.0, %v2814
      %v2816 = vpop.f32.mrf.mxu0
      %2817 = vmatprep.mubr.bf16.mxu0 0
      %2818 = vmatmul.mubr.bf16.gmra.mxu0 %v1414
      %v2819 = vpop.f32.mrf.mxu0
      %v2820 = vadd.f32 0.0, %v2819
      %v2821 = vpop.f32.mrf.mxu0
      %v2822 = vpop.f32.mrf.mxu0
      %v2823 = vadd.f32 0.0, %v2822
      %v2824 = vpop.f32.mrf.mxu0
      %2825 = vmatprep.mubr.bf16.mxu0 0
      %2826 = vmatmul.mubr.bf16.gmra.mxu0 %v1417
      %v2827 = vpop.f32.mrf.mxu0
      %v2828 = vadd.f32 0.0, %v2827
      %v2829 = vpop.f32.mrf.mxu0
      %v2830 = vpop.f32.mrf.mxu0
      %v2831 = vadd.f32 0.0, %v2830
      %v2832 = vpop.f32.mrf.mxu0
      %2833 = vmatprep.mubr.bf16.mxu0 0
      %2834 = vmatmul.mubr.bf16.gmra.mxu0 %v1420
      %v2835 = vpop.f32.mrf.mxu0
      %v2836 = vadd.f32 0.0, %v2835
      %v2837 = vpop.f32.mrf.mxu0
      %v2838 = vpop.f32.mrf.mxu0
      %v2839 = vadd.f32 0.0, %v2838
      %v2840 = vpop.f32.mrf.mxu0
      %2841 = vmatprep.mubr.bf16.mxu0 0
      %2842 = vmatmul.mubr.bf16.gmra.mxu0 %v1423
      %v2843 = vpop.f32.mrf.mxu0
      %v2844 = vadd.f32 0.0, %v2843
      %v2845 = vpop.f32.mrf.mxu0
      %v2846 = vpop.f32.mrf.mxu0
      %v2847 = vadd.f32 0.0, %v2846
      %v2848 = vpop.f32.mrf.mxu0
      %2849 = vmatprep.mubr.bf16.mxu0 0
      %2850 = vmatmul.mubr.bf16.gmra.mxu0 %v1426
      %v2851 = vpop.f32.mrf.mxu0
      %v2852 = vadd.f32 0.0, %v2851
      %v2853 = vpop.f32.mrf.mxu0
      %v2854 = vpop.f32.mrf.mxu0
      %v2855 = vadd.f32 0.0, %v2854
      %v2856 = vpop.f32.mrf.mxu0
      %2857 = vmatprep.mubr.bf16.mxu0 0
      %2858 = vmatmul.mubr.bf16.gmra.mxu0 %v1429
      %v2859 = vpop.f32.mrf.mxu0
      %v2860 = vadd.f32 0.0, %v2859
      %v2861 = vpop.f32.mrf.mxu0
      %v2862 = vpop.f32.mrf.mxu0
      %v2863 = vadd.f32 0.0, %v2862
      %v2864 = vpop.f32.mrf.mxu0
      %2865 = vmatprep.mubr.bf16.mxu0 0
      %2866 = vmatmul.mubr.bf16.gmra.mxu0 %v1432
      %v2867 = vpop.f32.mrf.mxu0
      %v2868 = vadd.f32 0.0, %v2867
      %v2869 = vpop.f32.mrf.mxu0
      %v2870 = vpop.f32.mrf.mxu0
      %v2871 = vadd.f32 0.0, %v2870
      %v2872 = vpop.f32.mrf.mxu0
      %2873 = vmatprep.mubr.bf16.mxu0 0
      %2874 = vmatmul.mubr.bf16.gmra.mxu0 %v2078
      %v2875 = vpop.f32.mrf.mxu0
      %v2876 = vadd.f32 0.0, %v2875
      %v2877 = vpop.f32.mrf.mxu0
      %v2878 = vpop.f32.mrf.mxu0
      %v2879 = vadd.f32 0.0, %v2878
      %v2880 = vpop.f32.mrf.mxu0
      %2881 = vmatprep.mubr.bf16.mxu0 0
      %2882 = vmatmul.mubr.bf16.gmra.mxu0 %v2724
      %v2883 = vpop.f32.mrf.mxu0
      %v2884 = vadd.f32 0.0, %v2883
      %v2885 = vpop.f32.mrf.mxu0
      %v2886 = vpop.f32.mrf.mxu0
      %v2887 = vadd.f32 0.0, %v2886
      %v2888 = vpop.f32.mrf.mxu0
      %2889 = vdwg.mxu0
      %v2890 = vadd.f32 %v2678, %v2764
      %v2891 = vadd.f32 %v2679, %v2767
      %v2892 = vadd.f32 %v2680, %v2772
      %v2893 = vadd.f32 %v2681, %v2775
      %v2894 = vadd.f32 %v2682, %v2780
      %v2895 = vadd.f32 %v2683, %v2783
      %v2896 = vadd.f32 %v2684, %v2788
      %v2897 = vadd.f32 %v2685, %v2791
      %v2898 = vadd.f32 %v2686, %v2796
      %v2899 = vadd.f32 %v2687, %v2799
      %v2900 = vadd.f32 %v2688, %v2804
      %v2901 = vadd.f32 %v2689, %v2807
      %v2902 = vadd.f32 %v2690, %v2812
      %v2903 = vadd.f32 %v2691, %v2815
      %v2904 = vadd.f32 %v2692, %v2820
      %v2905 = vadd.f32 %v2693, %v2823
      %v2906 = vadd.f32 %v2694, %v2828
      %v2907 = vadd.f32 %v2695, %v2831
      %v2908 = vadd.f32 %v2696, %v2836
      %v2909 = vadd.f32 %v2697, %v2839
      %v2910 = vadd.f32 %v2698, %v2844
      %v2911 = vadd.f32 %v2699, %v2847
      %v2912 = vadd.f32 %v2700, %v2852
      %v2913 = vadd.f32 %v2701, %v2855
      %v2914 = vadd.f32 %v2702, %v2860
      %v2915 = vadd.f32 %v2703, %v2863
      %v2916 = vadd.f32 %v2704, %v2868
      %v2917 = vadd.f32 %v2705, %v2871
      %v2918 = vadd.f32 %v2706, %v2876
      %v2919 = vadd.f32 %v2707, %v2879
      %v2920 = vadd.f32 %v2708, %v2884
      %v2921 = vadd.f32 %v2709, %v2887
      %v2922 = vsel %vm699, %v2890, 0.0
      %v2923 = vsel %vm699, %v2891, 0.0
      %v2924 = vadd.f32 %v2922, %v2923
      %v2925 = vsel %vm699, %v2892, 0.0
      %v2926 = vadd.f32 %v2924, %v2925
      %v2927 = vsel %vm699, %v2893, 0.0
      %v2928 = vadd.f32 %v2926, %v2927
      %v2929 = vsel %vm699, %v2894, 0.0
      %v2930 = vadd.f32 %v2928, %v2929
      %v2931 = vsel %vm699, %v2895, 0.0
      %v2932 = vadd.f32 %v2930, %v2931
      %v2933 = vsel %vm699, %v2896, 0.0
      %v2934 = vadd.f32 %v2932, %v2933
      %v2935 = vsel %vm699, %v2897, 0.0
      %v2936 = vadd.f32 %v2934, %v2935
      %v2937 = vsel %vm699, %v2898, 0.0
      %v2938 = vadd.f32 %v2936, %v2937
      %v2939 = vsel %vm699, %v2899, 0.0
      %v2940 = vadd.f32 %v2938, %v2939
      %v2941 = vsel %vm699, %v2900, 0.0
      %v2942 = vadd.f32 %v2940, %v2941
      %v2943 = vsel %vm699, %v2901, 0.0
      %v2944 = vadd.f32 %v2942, %v2943
      %v2945 = vsel %vm699, %v2902, 0.0
      %v2946 = vadd.f32 %v2944, %v2945
      %v2947 = vsel %vm699, %v2903, 0.0
      %v2948 = vadd.f32 %v2946, %v2947
      %v2949 = vsel %vm699, %v2904, 0.0
      %v2950 = vadd.f32 %v2948, %v2949
      %v2951 = vsel %vm699, %v2905, 0.0
      %v2952 = vadd.f32 %v2950, %v2951
      %v2953 = vsel %vm699, %v2906, 0.0
      %v2954 = vadd.f32 %v2952, %v2953
      %v2955 = vsel %vm699, %v2907, 0.0
      %v2956 = vadd.f32 %v2954, %v2955
      %v2957 = vsel %vm699, %v2908, 0.0
      %v2958 = vadd.f32 %v2956, %v2957
      %v2959 = vsel %vm699, %v2909, 0.0
      %v2960 = vadd.f32 %v2958, %v2959
      %v2961 = vsel %vm699, %v2910, 0.0
      %v2962 = vadd.f32 %v2960, %v2961
      %v2963 = vsel %vm699, %v2911, 0.0
      %v2964 = vadd.f32 %v2962, %v2963
      %v2965 = vsel %vm699, %v2912, 0.0
      %v2966 = vadd.f32 %v2964, %v2965
      %v2967 = vsel %vm699, %v2913, 0.0
      %v2968 = vadd.f32 %v2966, %v2967
      %v2969 = vsel %vm699, %v2914, 0.0
      %v2970 = vadd.f32 %v2968, %v2969
      %v2971 = vsel %vm699, %v2915, 0.0
      %v2972 = vadd.f32 %v2970, %v2971
      %v2973 = vsel %vm699, %v2916, 0.0
      %v2974 = vadd.f32 %v2972, %v2973
      %v2975 = vsel %vm699, %v2917, 0.0
      %v2976 = vadd.f32 %v2974, %v2975
      %v2977 = vsel %vm699, %v2918, 0.0
      %v2978 = vadd.f32 %v2976, %v2977
      %v2979 = vsel %vm699, %v2919, 0.0
      %v2980 = vadd.f32 %v2978, %v2979
      %v2981 = vsel %vm699, %v2920, 0.0
      %v2982 = vadd.f32 %v2980, %v2981
      %v2983 = vsel %vm699, %v2921, 0.0
      %v2984 = vadd.f32 %v2982, %v2983
      %v2985 = vrot.slane %v2984, 4
      %v2986 = vadd.f32 %v2984, %v2985
      %v2987 = vrot.slane %v2986, 2
      %v2988 = vadd.f32 %v2986, %v2987
      %v2989 = vrot.slane %v2988, 1
      %v2990 = vadd.f32 %v2988, %v2989
      %v2991 = vmul.f32 %v2990, 0.00390625
      %v2992 = vsub.f32 %v2890, %v2991
      %v2993 = vsub.f32 %v2891, %v2991
      %v2994 = vsub.f32 %v2892, %v2991
      %v2995 = vsub.f32 %v2893, %v2991
      %v2996 = vsub.f32 %v2894, %v2991
      %v2997 = vsub.f32 %v2895, %v2991
      %v2998 = vsub.f32 %v2896, %v2991
      %v2999 = vsub.f32 %v2897, %v2991
      %v3000 = vsub.f32 %v2898, %v2991
      %v3001 = vsub.f32 %v2899, %v2991
      %v3002 = vsub.f32 %v2900, %v2991
      %v3003 = vsub.f32 %v2901, %v2991
      %v3004 = vsub.f32 %v2902, %v2991
      %v3005 = vsub.f32 %v2903, %v2991
      %v3006 = vsub.f32 %v2904, %v2991
      %v3007 = vsub.f32 %v2905, %v2991
      %v3008 = vsub.f32 %v2906, %v2991
      %v3009 = vsub.f32 %v2907, %v2991
      %v3010 = vsub.f32 %v2908, %v2991
      %v3011 = vsub.f32 %v2909, %v2991
      %v3012 = vsub.f32 %v2910, %v2991
      %v3013 = vsub.f32 %v2911, %v2991
      %v3014 = vsub.f32 %v2912, %v2991
      %v3015 = vsub.f32 %v2913, %v2991
      %v3016 = vsub.f32 %v2914, %v2991
      %v3017 = vsub.f32 %v2915, %v2991
      %v3018 = vsub.f32 %v2916, %v2991
      %v3019 = vsub.f32 %v2917, %v2991
      %v3020 = vsub.f32 %v2918, %v2991
      %v3021 = vsub.f32 %v2919, %v2991
      %v3022 = vsub.f32 %v2920, %v2991
      %v3023 = vsub.f32 %v2921, %v2991
      %v3024 = vmul.f32 %v2992, %v2992
      %v3025 = vmul.f32 %v2993, %v2993
      %v3026 = vmul.f32 %v2994, %v2994
      %v3027 = vmul.f32 %v2995, %v2995
      %v3028 = vmul.f32 %v2996, %v2996
      %v3029 = vmul.f32 %v2997, %v2997
      %v3030 = vmul.f32 %v2998, %v2998
      %v3031 = vmul.f32 %v2999, %v2999
      %v3032 = vmul.f32 %v3000, %v3000
      %v3033 = vmul.f32 %v3001, %v3001
      %v3034 = vmul.f32 %v3002, %v3002
      %v3035 = vmul.f32 %v3003, %v3003
      %v3036 = vmul.f32 %v3004, %v3004
      %v3037 = vmul.f32 %v3005, %v3005
      %v3038 = vmul.f32 %v3006, %v3006
      %v3039 = vmul.f32 %v3007, %v3007
      %v3040 = vmul.f32 %v3008, %v3008
      %v3041 = vmul.f32 %v3009, %v3009
      %v3042 = vmul.f32 %v3010, %v3010
      %v3043 = vmul.f32 %v3011, %v3011
      %v3044 = vmul.f32 %v3012, %v3012
      %v3045 = vmul.f32 %v3013, %v3013
      %v3046 = vmul.f32 %v3014, %v3014
      %v3047 = vmul.f32 %v3015, %v3015
      %v3048 = vmul.f32 %v3016, %v3016
      %v3049 = vmul.f32 %v3017, %v3017
      %v3050 = vmul.f32 %v3018, %v3018
      %v3051 = vmul.f32 %v3019, %v3019
      %v3052 = vmul.f32 %v3020, %v3020
      %v3053 = vmul.f32 %v3021, %v3021
      %v3054 = vmul.f32 %v3022, %v3022
      %v3055 = vmul.f32 %v3023, %v3023
      %v3056 = vsel %vm699, %v3024, 0.0
      %v3057 = vsel %vm699, %v3025, 0.0
      %v3058 = vadd.f32 %v3056, %v3057
      %v3059 = vsel %vm699, %v3026, 0.0
      %v3060 = vadd.f32 %v3058, %v3059
      %v3061 = vsel %vm699, %v3027, 0.0
      %v3062 = vadd.f32 %v3060, %v3061
      %v3063 = vsel %vm699, %v3028, 0.0
      %v3064 = vadd.f32 %v3062, %v3063
      %v3065 = vsel %vm699, %v3029, 0.0
      %v3066 = vadd.f32 %v3064, %v3065
      %v3067 = vsel %vm699, %v3030, 0.0
      %v3068 = vadd.f32 %v3066, %v3067
      %v3069 = vsel %vm699, %v3031, 0.0
      %v3070 = vadd.f32 %v3068, %v3069
      %v3071 = vsel %vm699, %v3032, 0.0
      %v3072 = vadd.f32 %v3070, %v3071
      %v3073 = vsel %vm699, %v3033, 0.0
      %v3074 = vadd.f32 %v3072, %v3073
      %v3075 = vsel %vm699, %v3034, 0.0
      %v3076 = vadd.f32 %v3074, %v3075
      %v3077 = vsel %vm699, %v3035, 0.0
      %v3078 = vadd.f32 %v3076, %v3077
      %v3079 = vsel %vm699, %v3036, 0.0
      %v3080 = vadd.f32 %v3078, %v3079
      %v3081 = vsel %vm699, %v3037, 0.0
      %v3082 = vadd.f32 %v3080, %v3081
      %v3083 = vsel %vm699, %v3038, 0.0
      %v3084 = vadd.f32 %v3082, %v3083
      %v3085 = vsel %vm699, %v3039, 0.0
      %v3086 = vadd.f32 %v3084, %v3085
      %v3087 = vsel %vm699, %v3040, 0.0
      %v3088 = vadd.f32 %v3086, %v3087
      %v3089 = vsel %vm699, %v3041, 0.0
      %v3090 = vadd.f32 %v3088, %v3089
      %v3091 = vsel %vm699, %v3042, 0.0
      %v3092 = vadd.f32 %v3090, %v3091
      %v3093 = vsel %vm699, %v3043, 0.0
      %v3094 = vadd.f32 %v3092, %v3093
      %v3095 = vsel %vm699, %v3044, 0.0
      %v3096 = vadd.f32 %v3094, %v3095
      %v3097 = vsel %vm699, %v3045, 0.0
      %v3098 = vadd.f32 %v3096, %v3097
      %v3099 = vsel %vm699, %v3046, 0.0
      %v3100 = vadd.f32 %v3098, %v3099
      %v3101 = vsel %vm699, %v3047, 0.0
      %v3102 = vadd.f32 %v3100, %v3101
      %v3103 = vsel %vm699, %v3048, 0.0
      %v3104 = vadd.f32 %v3102, %v3103
      %v3105 = vsel %vm699, %v3049, 0.0
      %v3106 = vadd.f32 %v3104, %v3105
      %v3107 = vsel %vm699, %v3050, 0.0
      %v3108 = vadd.f32 %v3106, %v3107
      %v3109 = vsel %vm699, %v3051, 0.0
      %v3110 = vadd.f32 %v3108, %v3109
      %v3111 = vsel %vm699, %v3052, 0.0
      %v3112 = vadd.f32 %v3110, %v3111
      %v3113 = vsel %vm699, %v3053, 0.0
      %v3114 = vadd.f32 %v3112, %v3113
      %v3115 = vsel %vm699, %v3054, 0.0
      %v3116 = vadd.f32 %v3114, %v3115
      %v3117 = vsel %vm699, %v3055, 0.0
      %v3118 = vadd.f32 %v3116, %v3117
      %v3119 = vrot.slane %v3118, 4
      %v3120 = vadd.f32 %v3118, %v3119
      %v3121 = vrot.slane %v3120, 2
      %v3122 = vadd.f32 %v3120, %v3121
      %v3123 = vrot.slane %v3122, 1
      %v3124 = vadd.f32 %v3122, %v3123
      %3125 = vst.msk [vmem:[%s194] sm:$0xff] %vm699, %v2990
      %3126 = vst.msk [vmem:[%s200] sm:$0xff] %vm699, %v3124
      %s3127 = sadd.s32 %s19, %s20
      %p3128 = scmp.lt.s32.totalorder %s3127, 1
      %s3129 = scalar_select %p3128, %s3127, 1
      %s3130 = smul.addr %s3129, 8
      %s3131 = scalar_lea.vmem %s2, %s3130
      %s3132 = sadd.s32 %s19, %s20
      %p3133 = scmp.lt.s32.totalorder %s3132, 1
      %s3134 = scalar_select %p3133, %s3132, 1
      %s3135 = smul.addr %s3134, 8
      %s3136 = scalar_lea.vmem %s3, %s3135
      // Predicated region
      $region29: #{tpu_custom_call.1} parent=27 // pred_check
        %p3137 = pneg %p94
      $region30: #{tpu_custom_call.1} parent=27 // pred_check_branch
        %3139 = sbr.rel (%p3137) target = $region32
      $region31: #{tpu_custom_call.1} parent=27 // pred_region
        %s3140 = sadd.s32 %s19, %s20
      $region32: #{tpu_custom_call.1} parent=27 // pred_fallthru
        _
      // Predicated region
      $region33: #{tpu_custom_call.1} parent=27 // pred_check
        %p3141 = pneg %p122
      $region34: #{tpu_custom_call.1} parent=27 // pred_check_branch
        %3143 = sbr.rel (%p3141) target = $region36
      $region35: #{tpu_custom_call.1} parent=27 // pred_region
        %s3144 = sadd.s32 %s19, %s20
      $region36: #{tpu_custom_call.1} parent=27 // pred_fallthru
        _
    $region28: #{tpu_custom_call.1} parent=5 // pred_fallthru
      _
    %p3145 = scmp.le.s32.totalorder 2, %s10
    // Predicated region
    $region37: #{tpu_custom_call.1} parent=5 // pred_check
      %p3146 = pneg %p3145
    $region38: #{tpu_custom_call.1} parent=5 // pred_check_branch
      %3148 = sbr.rel (%p3146) target = $region40
    $region39: #{tpu_custom_call.1} parent=5 // pred_region
      %s3149 = ssub.s32 %s10, 2
      // Predicated region
      $region41: #{tpu_custom_call.1} parent=39 // pred_check
        %p3150 = pneg %p100
      $region42: #{tpu_custom_call.1} parent=39 // pred_check_branch
        %3152 = sbr.rel (%p3150) target = $region44
      $region43: #{tpu_custom_call.1} parent=39 // pred_region
        %s3153 = sadd.s32 %s21, %s22
        %p3154 = scmp.lt.s32.totalorder %s3153, 1
        %s3155 = scalar_select %p3154, %s3153, 1
        %s3156 = smul.addr %s3155, 8
        %s3157 = scalar_lea.vmem %s2, %s3156
      $region44: #{tpu_custom_call.1} parent=39 // pred_fallthru
        _
      // Predicated region
      $region45: #{tpu_custom_call.1} parent=39 // pred_check
        %p3158 = pneg %p128
      $region46: #{tpu_custom_call.1} parent=39 // pred_check_branch
        %3160 = sbr.rel (%p3158) target = $region48
      $region47: #{tpu_custom_call.1} parent=39 // pred_region
        %s3161 = sadd.s32 %s21, %s22
        %p3162 = scmp.lt.s32.totalorder %s3161, 1
        %s3163 = scalar_select %p3162, %s3161, 1
        %s3164 = smul.addr %s3163, 8
        %s3165 = scalar_lea.vmem %s3, %s3164
      $region48: #{tpu_custom_call.1} parent=39 // pred_fallthru
        _
    $region40: #{tpu_custom_call.1} parent=5 // pred_fallthru
      _
  $region6: #{tpu_custom_call.1} parent=0 // loop_footer
    %s14 = sadd.s32 1, %s10
  $region7: #{tpu_custom_call.1} parent=0 // loop_footer_branch
    %9 = sbr.rel target = $region3
  $region8: #{tpu_custom_call.1} parent=0 // loop_exit
    _

</llo_original>
